<compile_context>
chip_gen: v7x
topology: tpu7x:2x2x1
jax: 0.10.0
libtpu: 0.0.40
codegen_flags: <defaults>
</compile_context>

<pallas_src>
import functools

import jax
import jax.numpy as jnp
from jax import lax
from jax.experimental import pallas as pl
from jax.experimental.pallas import tpu as pltpu


# --------------------------------- kernel -----------------------------------

def _pnet_kernel(b, x_ref, w1_ref, b1_ref, w2_ref, b2_ref, w3_ref, b3_ref,
                 wh_ref, bh_ref, alpha_ref, out_ref):
    f32, bf16 = jnp.float32, jnp.bfloat16

    # conv1 (3->10, ky taps fused along K via wrapper im2col) + BN + PReLU.
    x = x_ref[...].reshape(16 * b, 162)                               # bf16
    y1 = jnp.dot(x, w1_ref[...], preferred_element_type=f32) + b1_ref[...]
    y1 = jnp.where(y1 >= 0.0, y1, alpha_ref[0] * y1).astype(bf16)     # (16b,160)

    # MaxPool2d(3, stride=2), floor mode — exact, no matmuls.
    # W direction: max over lanes {w, w+1, w+2}*10 + c  -> lanes w*10+c, w=0..13.
    wmax = jnp.maximum(jnp.maximum(y1[:, 0:140], y1[:, 10:150]), y1[:, 20:160])
    # H direction: max over rows r..r+2 (2 full-slab maxima), keep even starts.
    hm = jnp.maximum(jnp.maximum(wmax[0:14 * b], wmax[b:15 * b]),
                     wmax[2 * b:16 * b])                              # (14b,140)
    p = jnp.concatenate([hm[2 * k * b:(2 * k + 1) * b] for k in range(7)],
                        axis=0)                                       # (7b,140)

    # conv2 (10->16; the stride-2 W downselect is folded into w2_ref).
    acc = jnp.dot(p[0:5 * b], w2_ref[0], preferred_element_type=f32)
    acc = acc + jnp.dot(p[b:6 * b], w2_ref[1], preferred_element_type=f32)
    acc = acc + jnp.dot(p[2 * b:7 * b], w2_ref[2], preferred_element_type=f32)
    y2 = acc + b2_ref[...]
    y2 = jnp.where(y2 >= 0.0, y2, alpha_ref[1] * y2).astype(bf16)     # (5b,80)

    # conv3 (16->32).
    acc = jnp.dot(y2[0:3 * b], w3_ref[0], preferred_element_type=f32)
    acc = acc + jnp.dot(y2[b:4 * b], w3_ref[1], preferred_element_type=f32)
    acc = acc + jnp.dot(y2[2 * b:5 * b], w3_ref[2], preferred_element_type=f32)
    y3 = acc + b3_ref[...]
    y3 = jnp.where(y3 >= 0.0, y3, alpha_ref[2] * y3).astype(bf16)     # (3b,96)

    # Fused 1x1 heads (cond + 4 offsets, padded to 8 lanes per column) as one
    # block-diagonal matmul -> single output store per step.   (3b, 24)
    out_ref[...] = (jnp.dot(y3, wh_ref[...], preferred_element_type=f32)
                    + bh_ref[...])


# ------------------------------ wrapper helpers ------------------------------

def _fold_bn(w, b, bn, eps=1e-5):
    gamma, beta, mean, var = bn
    scale = gamma / jnp.sqrt(var + eps)
    return w * scale[None, None, None, :], (b - mean) * scale + beta


def _tap_slabs(w_hwio, w_out, lanes_in, col_stride):
    """(3,3,Cin,Cout) conv weight -> per-ky Toeplitz slabs (3, lanes_in, w_out*Cout).

    col_stride is the lane stride between adjacent output columns' input taps
    (Cin for dense input, 2*Cin when the pool's stride-2 downselect is folded).
    """
    kh, kw, cin, cout = w_hwio.shape
    t = jnp.zeros((kh, lanes_in, w_out * cout), jnp.float32)
    for dy in range(kh):
        for dx in range(kw):
            for j in range(w_out):
                r0 = (j + dx) * col_stride
                t = t.at[dy, r0:r0 + cin, j * cout:(j + 1) * cout].set(
                    w_hwio[dy, dx])
    return t


# --------------------------------- wrapper -----------------------------------

@jax.jit
def pnet_forward(x_nchw, params):
    n = x_nchw.shape[0]
    assert x_nchw.shape[1:] == (3, 16, 16)

    # Batch tiling: tiles of <=256 images (multiple of 8) with minimal padding;
    # use >=2 grid steps when the batch allows so the "parallel" axis can be
    # sharded across both v7x TensorCores (neutral on v5e/v6e).
    n8 = max(8, ((n + 7) // 8) * 8)
    g = -(-n8 // 256)
    if n8 >= 64:
        g = max(g, 2)
    b_tile = ((-(-n8 // g) + 7) // 8) * 8
    n_pad = g * b_tile

    # ---- input: NCHW -> NHWC, conv1 zero-pad, wrapper-side im2col over the 3
    # ky taps -> lane-dense bf16 slab (16, Np, 162), lanes = [ky*54 + w*3 + c].
    x = jnp.transpose(x_nchw, (0, 2, 3, 1)).astype(jnp.float32)     # (N,16,16,3)
    x = jnp.pad(x, ((0, n_pad - n), (1, 1), (1, 1), (0, 0)))        # (Np,18,18,3)
    x = x.reshape(n_pad, 18, 54).astype(jnp.bfloat16)
    xi = jnp.stack([x[:, r:r + 3, :].reshape(n_pad, 162) for r in range(16)],
                   axis=0)                                          # (16,Np,162)

    # ---- weights: fold BN, build Toeplitz tap slabs, fused head, bf16 cast ---
    w1, b1 = _fold_bn(params["w1"], params["b1"], params["bn1"])
    w2, b2 = _fold_bn(params["w2"], params["b2"], params["bn2"])
    w3, b3 = _fold_bn(params["w3"], params["b3"], params["bn3"])
    w1t = _tap_slabs(w1, 16, 54, 3).reshape(162, 160)   # ky-fused conv1 slab
    w2t = _tap_slabs(w2, 5, 140, 20)                    # (3,140,80) pool downselect folded
    w3t = _tap_slabs(w3, 3, 80, 16)                     # (3, 80,96)
    b1r = jnp.tile(b1, 16).reshape(1, 160)
    b2r = jnp.tile(b2, 5).reshape(1, 80)
    b3r = jnp.tile(b3, 3).reshape(1, 96)

    whead = jnp.concatenate([params["wc"].reshape(32, 1),
                             params["wo"].reshape(32, 4)], axis=1)      # (32,5)
    bhead = jnp.concatenate([params["bc"], params["bo"]])               # (5,)
    wh = jnp.zeros((96, 24), jnp.float32)
    bh = jnp.zeros((1, 24), jnp.float32)
    for q in range(3):
        wh = wh.at[32 * q:32 * (q + 1), 8 * q:8 * q + 5].set(whead)
        bh = bh.at[0, 8 * q:8 * q + 5].set(bhead)

    bf16 = jnp.bfloat16
    w1t, w2t, w3t, wh = (w1t.astype(bf16), w2t.astype(bf16),
                         w3t.astype(bf16), wh.astype(bf16))

    const = lambda shape: pl.BlockSpec(shape, lambda i: (0,) * len(shape))

    out = pl.pallas_call(
        functools.partial(_pnet_kernel, b_tile),
        grid=(g,),
        in_specs=[
            pl.BlockSpec((16, b_tile, 162), lambda i: (0, i, 0)),
            const((162, 160)), const((1, 160)),
            const((3, 140, 80)), const((1, 80)),
            const((3, 80, 96)), const((1, 96)),
            const((96, 24)), const((1, 24)),
            pl.BlockSpec(memory_space=pltpu.MemorySpace.SMEM),   # PReLU alphas
        ],
        out_specs=pl.BlockSpec((3 * b_tile, 24), lambda i: (i, 0)),
        out_shape=jax.ShapeDtypeStruct((3 * n_pad, 24), jnp.float32),
        compiler_params=pltpu.CompilerParams(
            dimension_semantics=("parallel",),
            vmem_limit_bytes=32 * 1024 * 1024),
    )(xi, w1t, b1r, w2t, b2r, w3t, b3r, wh, bh, params["alphas"])

    # (g*3*B, 24) -> (N, 3, 3, 8) with lane layout [col*8 + channel].
    out = out.reshape(g, 3, b_tile, 24).transpose(0, 2, 1, 3)
    out = out.reshape(n_pad, 3, 3, 8)[:n]
    cond = jax.nn.sigmoid(out[..., 0:1])                            # (N,3,3,1)
    off = out[..., 1:5]                                             # (N,3,3,4)
    return jnp.transpose(cond, (0, 3, 1, 2)), jnp.transpose(off, (0, 3, 1, 2))


# --------------------------- deterministic params ----------------------------

def init_params(key):
    ks = jax.random.split(key, 20)
    nrm = lambda k, s, sc=0.1: sc * jax.random.normal(k, s, jnp.float32)
    uni = lambda k, s: jax.random.uniform(k, s, jnp.float32, 0.5, 1.5)
    p = {}
    p["w1"] = nrm(ks[0], (3, 3, 3, 10));   p["b1"] = nrm(ks[1], (10,))
    p["bn1"] = (uni(ks[2], (10,)), nrm(ks[3], (10,)),
                nrm(ks[4], (10,)), uni(ks[5], (10,)))       # gamma,beta,mean,var
    p["w2"] = nrm(ks[6], (3, 3, 10, 16));  p["b2"] = nrm(ks[7], (16,))
    p["bn2"] = (uni(ks[8], (16,)), nrm(ks[9], (16,)),
                nrm(ks[10], (16,)), uni(ks[11], (16,)))
    p["w3"] = nrm(ks[12], (3, 3, 16, 32)); p["b3"] = nrm(ks[13], (32,))
    p["bn3"] = (uni(ks[14], (32,)), nrm(ks[15], (32,)),
                nrm(ks[16], (32,)), uni(ks[17], (32,)))
    p["wc"] = nrm(ks[18], (1, 1, 32, 1));  p["bc"] = jnp.zeros((1,), jnp.float32)
    p["wo"] = nrm(ks[19], (1, 1, 32, 4));  p["bo"] = jnp.zeros((4,), jnp.float32)
    p["alphas"] = jnp.array([0.25, 0.25, 0.25], jnp.float32)  # nn.PReLU() default
    return p


# ------------------------------ pure-JAX reference ---------------------------

def reference_forward(x_nchw, params, eps=1e-5):
    dn = ("NHWC", "HWIO", "NHWC")
    conv = lambda x, w, b, pad: lax.conv_general_dilated(
        x, w, (1, 1), pad, dimension_numbers=dn,
        precision=lax.Precision.HIGHEST) + b
    bn = lambda x, bnp: (x - bnp[2]) / jnp.sqrt(bnp[3] + eps) * bnp[0] + bnp[1]
    prelu = lambda x, a: jnp.where(x >= 0, x, a * x)
    a1, a2, a3 = params["alphas"]

    x = jnp.transpose(x_nchw, (0, 2, 3, 1)).astype(jnp.float32)
    y = prelu(bn(conv(x, params["w1"], params["b1"], ((1, 1), (1, 1))),
                 params["bn1"]), a1)
    y = lax.reduce_window(y, -jnp.inf, lax.max, (1, 3, 3, 1), (1, 2, 2, 1), "VALID")
    y = prelu(bn(conv(y, params["w2"], params["b2"], "VALID"), params["bn2"]), a2)
    y = prelu(bn(conv(y, params["w3"], params["b3"], "VALID"), params["bn3"]), a3)
    cond = jax.nn.sigmoid(conv(y, params["wc"], params["bc"], "VALID"))
    off = conv(y, params["wo"], params["bo"], "VALID")
    return jnp.transpose(cond, (0, 3, 1, 2)), jnp.transpose(off, (0, 3, 1, 2))


# ----------------------------------- main ------------------------------------

if __name__ == "__main__":
    key = jax.random.PRNGKey(0)
    kx, kp = jax.random.split(key)
    params = init_params(kp)

    # n=4 exercises the single-step (padded to B_TILE=8) path; n=300 exercises
    # the multi-step grid (2 steps of B_TILE=152) with batch padding.
    for n in (4, 300):
        x = jax.random.normal(jax.random.fold_in(kx, n), (n, 3, 16, 16),
                              jnp.float32)
        cond, off = pnet_forward(x, params)
        jax.block_until_ready((cond, off))

        cond_r, off_r = reference_forward(x, params)
        assert cond.shape == (n, 1, 3, 3) and off.shape == (n, 4, 3, 3)
        err = max(float(jnp.max(jnp.abs(cond - cond_r))),
                  float(jnp.max(jnp.abs(off - off_r))))
        # bf16 matmul operands (vs the f32 Precision.HIGHEST reference) through
        # a 3-conv stack: allow up to 2e-2 absolute deviation on O(1) outputs.
        assert err < 2e-2, f"mismatch vs reference (n={n}): {err}"

    print("KERNEL_OK")
</pallas_src>

<mosaic_0001>
module attributes {stable_mosaic.version = 11 : i64} {
  func.func @_pnet_kernel(%arg0: i32, %arg1: memref<16x8x162xbf16, #tpu.memory_space<vmem>>, %arg2: memref<162x160xbf16, #tpu.memory_space<vmem>>, %arg3: memref<1x160xf32, #tpu.memory_space<vmem>>, %arg4: memref<3x140x80xbf16, #tpu.memory_space<vmem>>, %arg5: memref<1x80xf32, #tpu.memory_space<vmem>>, %arg6: memref<3x80x96xbf16, #tpu.memory_space<vmem>>, %arg7: memref<1x96xf32, #tpu.memory_space<vmem>>, %arg8: memref<96x24xbf16, #tpu.memory_space<vmem>>, %arg9: memref<1x24xf32, #tpu.memory_space<vmem>>, %arg10: memref<3xf32, #tpu.memory_space<smem>>, %arg11: memref<24x24xf32, #tpu.memory_space<vmem>>) attributes {dimension_semantics = [#tpu.dimension_semantics<parallel>], iteration_bounds = array<i64: 1>, scalar_prefetch = 0 : i64, scratch_operands = 0 : i64, tpu.core_type = #tpu.core_type<tc>, window_params = [{transform_indices = @transform_0, window_bounds = array<i64: 16, 8, 162>}, {pipeline_mode = #tpu.pipeline_mode<synchronous>, transform_indices = @transform_1, window_bounds = array<i64: 162, 160>}, {pipeline_mode = #tpu.pipeline_mode<synchronous>, transform_indices = @transform_2, window_bounds = array<i64: 1, 160>}, {pipeline_mode = #tpu.pipeline_mode<synchronous>, transform_indices = @transform_3, window_bounds = array<i64: 3, 140, 80>}, {pipeline_mode = #tpu.pipeline_mode<synchronous>, transform_indices = @transform_4, window_bounds = array<i64: 1, 80>}, {pipeline_mode = #tpu.pipeline_mode<synchronous>, transform_indices = @transform_5, window_bounds = array<i64: 3, 80, 96>}, {pipeline_mode = #tpu.pipeline_mode<synchronous>, transform_indices = @transform_6, window_bounds = array<i64: 1, 96>}, {pipeline_mode = #tpu.pipeline_mode<synchronous>, transform_indices = @transform_7, window_bounds = array<i64: 96, 24>}, {pipeline_mode = #tpu.pipeline_mode<synchronous>, transform_indices = @transform_8, window_bounds = array<i64: 1, 24>}, {transform_indices = @transform_9, window_bounds = array<i64: 3>}, {transform_indices = @transform_10, window_bounds = array<i64: 24, 24>}]} {
    %c0 = arith.constant 0 : index
    %c0_0 = arith.constant 0 : index
    %c0_1 = arith.constant 0 : index
    %0 = vector.load %arg1[%c0, %c0_0, %c0_1] : memref<16x8x162xbf16, #tpu.memory_space<vmem>>, vector<16x8x162xbf16>
    %1 = vector.shape_cast %0 : vector<16x8x162xbf16> to vector<128x162xbf16>
    %c0_2 = arith.constant 0 : index
    %c0_3 = arith.constant 0 : index
    %2 = vector.load %arg2[%c0_2, %c0_3] : memref<162x160xbf16, #tpu.memory_space<vmem>>, vector<162x160xbf16>
    %cst = arith.constant dense<0.000000e+00> : vector<128x160xf32>
    %3 = tpu.matmul %1, %2, %cst {dimension_numbers = #tpu.dot_dimension_numbers<[1], [0], [0], [1], [0, 0, 1, 1], [], []>} : vector<128x162xbf16>, vector<162x160xbf16>, vector<128x160xf32> -> vector<128x160xf32>
    %c0_4 = arith.constant 0 : index
    %c0_5 = arith.constant 0 : index
    %4 = vector.load %arg3[%c0_4, %c0_5] : memref<1x160xf32, #tpu.memory_space<vmem>>, vector<1x160xf32>
    %5 = vector.broadcast %4 : vector<1x160xf32> to vector<128x160xf32>
    %6 = arith.addf %3, %5 : vector<128x160xf32>
    %cst_6 = arith.constant 0.000000e+00 : f32
    %7 = vector.broadcast %cst_6 : f32 to vector<128x160xf32>
    %8 = arith.cmpf oge, %6, %7 : vector<128x160xf32>
    %c0_7 = arith.constant 0 : index
    %9 = memref.load %arg10[%c0_7] : memref<3xf32, #tpu.memory_space<smem>>
    %10 = vector.broadcast %9 : f32 to vector<128x160xf32>
    %11 = arith.mulf %10, %6 : vector<128x160xf32>
    %12 = arith.select %8, %6, %11 : vector<128x160xi1>, vector<128x160xf32>
    %13 = arith.truncf %12 : vector<128x160xf32> to vector<128x160xbf16>
    %14 = vector.extract_strided_slice %13 {offsets = [0, 0], sizes = [128, 140], strides = [1, 1]} : vector<128x160xbf16> to vector<128x140xbf16>
    %15 = vector.extract_strided_slice %13 {offsets = [0, 10], sizes = [128, 140], strides = [1, 1]} : vector<128x160xbf16> to vector<128x140xbf16>
    %16 = arith.maximumf %14, %15 : vector<128x140xbf16>
    %17 = vector.extract_strided_slice %13 {offsets = [0, 20], sizes = [128, 140], strides = [1, 1]} : vector<128x160xbf16> to vector<128x140xbf16>
    %18 = arith.maximumf %16, %17 : vector<128x140xbf16>
    %19 = vector.extract_strided_slice %18 {offsets = [0, 0], sizes = [112, 140], strides = [1, 1]} : vector<128x140xbf16> to vector<112x140xbf16>
    %20 = vector.extract_strided_slice %18 {offsets = [8, 0], sizes = [112, 140], strides = [1, 1]} : vector<128x140xbf16> to vector<112x140xbf16>
    %21 = arith.maximumf %19, %20 : vector<112x140xbf16>
    %22 = vector.extract_strided_slice %18 {offsets = [16, 0], sizes = [112, 140], strides = [1, 1]} : vector<128x140xbf16> to vector<112x140xbf16>
    %23 = arith.maximumf %21, %22 : vector<112x140xbf16>
    %24 = vector.extract_strided_slice %23 {offsets = [0, 0], sizes = [8, 140], strides = [1, 1]} : vector<112x140xbf16> to vector<8x140xbf16>
    %25 = vector.extract_strided_slice %23 {offsets = [16, 0], sizes = [8, 140], strides = [1, 1]} : vector<112x140xbf16> to vector<8x140xbf16>
    %26 = vector.extract_strided_slice %23 {offsets = [32, 0], sizes = [8, 140], strides = [1, 1]} : vector<112x140xbf16> to vector<8x140xbf16>
    %27 = vector.extract_strided_slice %23 {offsets = [48, 0], sizes = [8, 140], strides = [1, 1]} : vector<112x140xbf16> to vector<8x140xbf16>
    %28 = vector.extract_strided_slice %23 {offsets = [64, 0], sizes = [8, 140], strides = [1, 1]} : vector<112x140xbf16> to vector<8x140xbf16>
    %29 = vector.extract_strided_slice %23 {offsets = [80, 0], sizes = [8, 140], strides = [1, 1]} : vector<112x140xbf16> to vector<8x140xbf16>
    %30 = vector.extract_strided_slice %23 {offsets = [96, 0], sizes = [8, 140], strides = [1, 1]} : vector<112x140xbf16> to vector<8x140xbf16>
    %31 = tpu.concatenate %24, %25, %26, %27, %28, %29, %30 in 0 : vector<8x140xbf16>, vector<8x140xbf16>, vector<8x140xbf16>, vector<8x140xbf16>, vector<8x140xbf16>, vector<8x140xbf16>, vector<8x140xbf16> -> vector<56x140xbf16>
    %32 = vector.extract_strided_slice %31 {offsets = [0, 0], sizes = [40, 140], strides = [1, 1]} : vector<56x140xbf16> to vector<40x140xbf16>
    %c0_8 = arith.constant 0 : index
    %c0_9 = arith.constant 0 : index
    %c0_10 = arith.constant 0 : index
    %33 = vector.load %arg4[%c0_8, %c0_9, %c0_10] : memref<3x140x80xbf16, #tpu.memory_space<vmem>>, vector<1x140x80xbf16>
    %34 = vector.shape_cast %33 : vector<1x140x80xbf16> to vector<140x80xbf16>
    %cst_11 = arith.constant dense<0.000000e+00> : vector<40x80xf32>
    %35 = tpu.matmul %32, %34, %cst_11 {dimension_numbers = #tpu.dot_dimension_numbers<[1], [0], [0], [1], [0, 0, 1, 1], [], []>} : vector<40x140xbf16>, vector<140x80xbf16>, vector<40x80xf32> -> vector<40x80xf32>
    %36 = vector.extract_strided_slice %31 {offsets = [8, 0], sizes = [40, 140], strides = [1, 1]} : vector<56x140xbf16> to vector<40x140xbf16>
    %c1 = arith.constant 1 : index
    %c0_12 = arith.constant 0 : index
    %c0_13 = arith.constant 0 : index
    %37 = vector.load %arg4[%c1, %c0_12, %c0_13] : memref<3x140x80xbf16, #tpu.memory_space<vmem>>, vector<1x140x80xbf16>
    %38 = vector.shape_cast %37 : vector<1x140x80xbf16> to vector<140x80xbf16>
    %cst_14 = arith.constant dense<0.000000e+00> : vector<40x80xf32>
    %39 = tpu.matmul %36, %38, %cst_14 {dimension_numbers = #tpu.dot_dimension_numbers<[1], [0], [0], [1], [0, 0, 1, 1], [], []>} : vector<40x140xbf16>, vector<140x80xbf16>, vector<40x80xf32> -> vector<40x80xf32>
    %40 = arith.addf %35, %39 : vector<40x80xf32>
    %41 = vector.extract_strided_slice %31 {offsets = [16, 0], sizes = [40, 140], strides = [1, 1]} : vector<56x140xbf16> to vector<40x140xbf16>
    %c2 = arith.constant 2 : index
    %c0_15 = arith.constant 0 : index
    %c0_16 = arith.constant 0 : index
    %42 = vector.load %arg4[%c2, %c0_15, %c0_16] : memref<3x140x80xbf16, #tpu.memory_space<vmem>>, vector<1x140x80xbf16>
    %43 = vector.shape_cast %42 : vector<1x140x80xbf16> to vector<140x80xbf16>
    %cst_17 = arith.constant dense<0.000000e+00> : vector<40x80xf32>
    %44 = tpu.matmul %41, %43, %cst_17 {dimension_numbers = #tpu.dot_dimension_numbers<[1], [0], [0], [1], [0, 0, 1, 1], [], []>} : vector<40x140xbf16>, vector<140x80xbf16>, vector<40x80xf32> -> vector<40x80xf32>
    %45 = arith.addf %40, %44 : vector<40x80xf32>
    %c0_18 = arith.constant 0 : index
    %c0_19 = arith.constant 0 : index
    %46 = vector.load %arg5[%c0_18, %c0_19] : memref<1x80xf32, #tpu.memory_space<vmem>>, vector<1x80xf32>
    %47 = vector.broadcast %46 : vector<1x80xf32> to vector<40x80xf32>
    %48 = arith.addf %45, %47 : vector<40x80xf32>
    %cst_20 = arith.constant 0.000000e+00 : f32
    %49 = vector.broadcast %cst_20 : f32 to vector<40x80xf32>
    %50 = arith.cmpf oge, %48, %49 : vector<40x80xf32>
    %c1_21 = arith.constant 1 : index
    %51 = memref.load %arg10[%c1_21] : memref<3xf32, #tpu.memory_space<smem>>
    %52 = vector.broadcast %51 : f32 to vector<40x80xf32>
    %53 = arith.mulf %52, %48 : vector<40x80xf32>
    %54 = arith.select %50, %48, %53 : vector<40x80xi1>, vector<40x80xf32>
    %55 = arith.truncf %54 : vector<40x80xf32> to vector<40x80xbf16>
    %56 = vector.extract_strided_slice %55 {offsets = [0, 0], sizes = [24, 80], strides = [1, 1]} : vector<40x80xbf16> to vector<24x80xbf16>
    %c0_22 = arith.constant 0 : index
    %c0_23 = arith.constant 0 : index
    %c0_24 = arith.constant 0 : index
    %57 = vector.load %arg6[%c0_22, %c0_23, %c0_24] : memref<3x80x96xbf16, #tpu.memory_space<vmem>>, vector<1x80x96xbf16>
    %58 = vector.shape_cast %57 : vector<1x80x96xbf16> to vector<80x96xbf16>
    %cst_25 = arith.constant dense<0.000000e+00> : vector<24x96xf32>
    %59 = tpu.matmul %56, %58, %cst_25 {dimension_numbers = #tpu.dot_dimension_numbers<[1], [0], [0], [1], [0, 0, 1, 1], [], []>} : vector<24x80xbf16>, vector<80x96xbf16>, vector<24x96xf32> -> vector<24x96xf32>
    %60 = vector.extract_strided_slice %55 {offsets = [8, 0], sizes = [24, 80], strides = [1, 1]} : vector<40x80xbf16> to vector<24x80xbf16>
    %c1_26 = arith.constant 1 : index
    %c0_27 = arith.constant 0 : index
    %c0_28 = arith.constant 0 : index
    %61 = vector.load %arg6[%c1_26, %c0_27, %c0_28] : memref<3x80x96xbf16, #tpu.memory_space<vmem>>, vector<1x80x96xbf16>
    %62 = vector.shape_cast %61 : vector<1x80x96xbf16> to vector<80x96xbf16>
    %cst_29 = arith.constant dense<0.000000e+00> : vector<24x96xf32>
    %63 = tpu.matmul %60, %62, %cst_29 {dimension_numbers = #tpu.dot_dimension_numbers<[1], [0], [0], [1], [0, 0, 1, 1], [], []>} : vector<24x80xbf16>, vector<80x96xbf16>, vector<24x96xf32> -> vector<24x96xf32>
    %64 = arith.addf %59, %63 : vector<24x96xf32>
    %65 = vector.extract_strided_slice %55 {offsets = [16, 0], sizes = [24, 80], strides = [1, 1]} : vector<40x80xbf16> to vector<24x80xbf16>
    %c2_30 = arith.constant 2 : index
    %c0_31 = arith.constant 0 : index
    %c0_32 = arith.constant 0 : index
    %66 = vector.load %arg6[%c2_30, %c0_31, %c0_32] : memref<3x80x96xbf16, #tpu.memory_space<vmem>>, vector<1x80x96xbf16>
    %67 = vector.shape_cast %66 : vector<1x80x96xbf16> to vector<80x96xbf16>
    %cst_33 = arith.constant dense<0.000000e+00> : vector<24x96xf32>
    %68 = tpu.matmul %65, %67, %cst_33 {dimension_numbers = #tpu.dot_dimension_numbers<[1], [0], [0], [1], [0, 0, 1, 1], [], []>} : vector<24x80xbf16>, vector<80x96xbf16>, vector<24x96xf32> -> vector<24x96xf32>
    %69 = arith.addf %64, %68 : vector<24x96xf32>
    %c0_34 = arith.constant 0 : index
    %c0_35 = arith.constant 0 : index
    %70 = vector.load %arg7[%c0_34, %c0_35] : memref<1x96xf32, #tpu.memory_space<vmem>>, vector<1x96xf32>
    %71 = vector.broadcast %70 : vector<1x96xf32> to vector<24x96xf32>
    %72 = arith.addf %69, %71 : vector<24x96xf32>
    %cst_36 = arith.constant 0.000000e+00 : f32
    %73 = vector.broadcast %cst_36 : f32 to vector<24x96xf32>
    %74 = arith.cmpf oge, %72, %73 : vector<24x96xf32>
    %c2_37 = arith.constant 2 : index
    %75 = memref.load %arg10[%c2_37] : memref<3xf32, #tpu.memory_space<smem>>
    %76 = vector.broadcast %75 : f32 to vector<24x96xf32>
    %77 = arith.mulf %76, %72 : vector<24x96xf32>
    %78 = arith.select %74, %72, %77 : vector<24x96xi1>, vector<24x96xf32>
    %79 = arith.truncf %78 : vector<24x96xf32> to vector<24x96xbf16>
    %c0_38 = arith.constant 0 : index
    %c0_39 = arith.constant 0 : index
    %80 = vector.load %arg8[%c0_38, %c0_39] : memref<96x24xbf16, #tpu.memory_space<vmem>>, vector<96x24xbf16>
    %cst_40 = arith.constant dense<0.000000e+00> : vector<24x24xf32>
    %81 = tpu.matmul %79, %80, %cst_40 {dimension_numbers = #tpu.dot_dimension_numbers<[1], [0], [0], [1], [0, 0, 1, 1], [], []>} : vector<24x96xbf16>, vector<96x24xbf16>, vector<24x24xf32> -> vector<24x24xf32>
    %c0_41 = arith.constant 0 : index
    %c0_42 = arith.constant 0 : index
    %82 = vector.load %arg9[%c0_41, %c0_42] : memref<1x24xf32, #tpu.memory_space<vmem>>, vector<1x24xf32>
    %83 = vector.broadcast %82 : vector<1x24xf32> to vector<24x24xf32>
    %84 = arith.addf %81, %83 : vector<24x24xf32>
    %c0_43 = arith.constant 0 : index
    %c0_44 = arith.constant 0 : index
    %85 = vector.load %arg11[%c0_43, %c0_44] : memref<24x24xf32, #tpu.memory_space<vmem>>, vector<24x24xf32>
    tpu.vector_store %arg11[%c0_43, %c0_44], %84 {strides = array<i32>} : memref<24x24xf32, #tpu.memory_space<vmem>>, vector<24x24xf32>,
    return
  }
  func.func @transform_0(%arg0: i32) -> (i32, i32, i32) {
    %c0_i32 = arith.constant 0 : i32
    %c0_i32_0 = arith.constant 0 : i32
    %c0_i32_1 = arith.constant 0 : i32
    return %c0_i32, %arg0, %c0_i32_0 : i32, i32, i32
  }
  func.func @transform_1(%arg0: i32) -> (i32, i32) {
    %c0_i32 = arith.constant 0 : i32
    %c0_i32_0 = arith.constant 0 : i32
    %c0_i32_1 = arith.constant 0 : i32
    return %c0_i32, %c0_i32_0 : i32, i32
  }
  func.func @transform_2(%arg0: i32) -> (i32, i32) {
    %c0_i32 = arith.constant 0 : i32
    %c0_i32_0 = arith.constant 0 : i32
    %c0_i32_1 = arith.constant 0 : i32
    return %c0_i32, %c0_i32_0 : i32, i32
  }
  func.func @transform_3(%arg0: i32) -> (i32, i32, i32) {
    %c0_i32 = arith.constant 0 : i32
    %c0_i32_0 = arith.constant 0 : i32
    %c0_i32_1 = arith.constant 0 : i32
    %c0_i32_2 = arith.constant 0 : i32
    return %c0_i32, %c0_i32_0, %c0_i32_1 : i32, i32, i32
  }
  func.func @transform_4(%arg0: i32) -> (i32, i32) {
    %c0_i32 = arith.constant 0 : i32
    %c0_i32_0 = arith.constant 0 : i32
    %c0_i32_1 = arith.constant 0 : i32
    return %c0_i32, %c0_i32_0 : i32, i32
  }
  func.func @transform_5(%arg0: i32) -> (i32, i32, i32) {
    %c0_i32 = arith.constant 0 : i32
    %c0_i32_0 = arith.constant 0 : i32
    %c0_i32_1 = arith.constant 0 : i32
    %c0_i32_2 = arith.constant 0 : i32
    return %c0_i32, %c0_i32_0, %c0_i32_1 : i32, i32, i32
  }
  func.func @transform_6(%arg0: i32) -> (i32, i32) {
    %c0_i32 = arith.constant 0 : i32
    %c0_i32_0 = arith.constant 0 : i32
    %c0_i32_1 = arith.constant 0 : i32
    return %c0_i32, %c0_i32_0 : i32, i32
  }
  func.func @transform_7(%arg0: i32) -> (i32, i32) {
    %c0_i32 = arith.constant 0 : i32
    %c0_i32_0 = arith.constant 0 : i32
    %c0_i32_1 = arith.constant 0 : i32
    return %c0_i32, %c0_i32_0 : i32, i32
  }
  func.func @transform_8(%arg0: i32) -> (i32, i32) {
    %c0_i32 = arith.constant 0 : i32
    %c0_i32_0 = arith.constant 0 : i32
    %c0_i32_1 = arith.constant 0 : i32
    return %c0_i32, %c0_i32_0 : i32, i32
  }
  func.func @transform_9(%arg0: i32) -> i32 {
    %c0_i32 = arith.constant 0 : i32
    %c0_i32_0 = arith.constant 0 : i32
    return %c0_i32 : i32
  }
  func.func @transform_10(%arg0: i32) -> (i32, i32) {
    %c0_i32 = arith.constant 0 : i32
    %c0_i32_0 = arith.constant 0 : i32
    return %arg0, %c0_i32 : i32, i32
  }
}

</mosaic_0001>

<llo_original>
// kernel: tile.18
$region0: #{tile.18}
  #allocation0 [shape = 's32[1]{0}', space=sflag, size = 0x4, scoped, tag = 'scoped memory for tile.18']
  %s0 = inlined_call_operand.vmem [shape: f32[10], index: 0, kind: input, shape index: {}]
  %s1 = inlined_call_operand.vmem [shape: f32[16,10], index: 1, kind: output, shape index: {}]
  // Predicated region
  $region2: #{tile.18} parent=0 // pred_check
    _
  $region3: #{tile.18} parent=0 // pred_check_branch
    %3 = sbr.rel (0) target = $region5
  $region4: #{tile.18} parent=0 // pred_region
    _
  $region5: #{tile.18} parent=0 // pred_fallthru
    _
  %v4 = vld [vmem:[%s0] ss:$0 sm:$0xff]
  %5 = vst [vmem:[%s1] sm:$0xff] %v4
  %s6 = scalar_lea.vmem %s1, 8
  %7 = vst [vmem:[%s6] sm:$0xff] %v4

// kernel: tile.19
$region0: #{tile.19}
  %s0 = inlined_call_operand.vmem [shape: f32[16,10], index: 0, kind: input, shape index: {}]
  %s1 = inlined_call_operand.vmem [shape: f32[1,160], index: 1, kind: output, shape index: {}]
  $region1: #{tile.19} parent=0
    #allocation0 [shape = 'u8[8192]{0}', space=vmem, size = 0x2000, scoped, tag = 'scoped mem for output reshape']
    %v2 = vld [vmem:[%s0] sm:$0x1]
    %vm3 = vcmask 80896
    %4 = vst.msk [vmem:[#allocation0] sm:$0x1] %vm3, %v2
    %s5 = scalar_lea.vmem %s0, 12
    %v6 = vld [vmem:[%s5] sm:$0x1]
    %s7 = scalar_lea.vmem %s0, 12
    %v8 = vld [vmem:[%s7] sm:$0x1]
    %vm9 = vcmask 64512
    %v10 = vsel %vm9, %v8, %v6
    %11 = vrot.lane.b32.xlu0 %v10, 120
    %v12 = vpop.permute.xlu0 %11
    %vm13 = vcmask 15360
    %s14 = scalar_lea.vmem [#allocation0], 8
    %15 = vst.msk [vmem:[%s14] sm:$0x1] %vm13, %v12
    %vm16 = vcmask 1048512
    %17 = vst.msk [vmem:[#allocation0] sm:$0x1] %vm16, %v12
    %s18 = scalar_lea.vmem %s0, 11
    %v19 = vld [vmem:[%s18] sm:$0x1]
    %20 = vrot.lane.b32.xlu0 %v19, 110
    %v21 = vpop.permute.xlu0 %20
    %vm22 = vcmask 982896
    %23 = vst.msk [vmem:[#allocation0] sm:$0x1] %vm22, %v21
    %s24 = scalar_lea.vmem %s0, 10
    %v25 = vld [vmem:[%s24] sm:$0x1]
    %26 = vrot.lane.b32.xlu0 %v25, 100
    %v27 = vpop.permute.xlu0 %26
    %vm28 = vcmask 900896
    %29 = vst.msk [vmem:[#allocation0] sm:$0x1] %vm28, %v27
    %s30 = scalar_lea.vmem %s0, 9
    %v31 = vld [vmem:[%s30] sm:$0x1]
    %32 = vrot.lane.b32.xlu0 %v31, 90
    %v33 = vpop.permute.xlu0 %32
    %vm34 = vcmask 818896
    %35 = vst.msk [vmem:[#allocation0] sm:$0x1] %vm34, %v33
    %s36 = scalar_lea.vmem %s0, 8
    %v37 = vld [vmem:[%s36] sm:$0x1]
    %38 = vrot.lane.b32.xlu0 %v37, 80
    %v39 = vpop.permute.xlu0 %38
    %vm40 = vcmask 736896
    %41 = vst.msk [vmem:[#allocation0] sm:$0x1] %vm40, %v39
    %s42 = scalar_lea.vmem %s0, 7
    %v43 = vld [vmem:[%s42] sm:$0x1]
    %44 = vrot.lane.b32.xlu0 %v43, 70
    %v45 = vpop.permute.xlu0 %44
    %vm46 = vcmask 654896
    %47 = vst.msk [vmem:[#allocation0] sm:$0x1] %vm46, %v45
    %s48 = scalar_lea.vmem %s0, 6
    %v49 = vld [vmem:[%s48] sm:$0x1]
    %50 = vrot.lane.b32.xlu0 %v49, 60
    %v51 = vpop.permute.xlu0 %50
    %vm52 = vcmask 572896
    %53 = vst.msk [vmem:[#allocation0] sm:$0x1] %vm52, %v51
    %s54 = scalar_lea.vmem %s0, 5
    %v55 = vld [vmem:[%s54] sm:$0x1]
    %56 = vrot.lane.b32.xlu0 %v55, 50
    %v57 = vpop.permute.xlu0 %56
    %vm58 = vcmask 490896
    %59 = vst.msk [vmem:[#allocation0] sm:$0x1] %vm58, %v57
    %s60 = scalar_lea.vmem %s0, 4
    %v61 = vld [vmem:[%s60] sm:$0x1]
    %62 = vrot.lane.b32.xlu0 %v61, 40
    %v63 = vpop.permute.xlu0 %62
    %vm64 = vcmask 408896
    %65 = vst.msk [vmem:[#allocation0] sm:$0x1] %vm64, %v63
    %s66 = scalar_lea.vmem %s0, 3
    %v67 = vld [vmem:[%s66] sm:$0x1]
    %68 = vrot.lane.b32.xlu0 %v67, 30
    %v69 = vpop.permute.xlu0 %68
    %vm70 = vcmask 326896
    %71 = vst.msk [vmem:[#allocation0] sm:$0x1] %vm70, %v69
    %s72 = scalar_lea.vmem %s0, 15
    %v73 = vld [vmem:[%s72] sm:$0x1]
    %74 = vrot.lane.b32.xlu0 %v73, 22
    %v75 = vpop.permute.xlu0 %74
    %vm76 = vcmask 261296
    %s77 = scalar_lea.vmem [#allocation0], 8
    %78 = vst.msk [vmem:[%s77] sm:$0x1] %vm76, %v75
    %s79 = scalar_lea.vmem %s0, 2
    %v80 = vld [vmem:[%s79] sm:$0x1]
    %81 = vrot.lane.b32.xlu0 %v80, 20
    %v82 = vpop.permute.xlu0 %81
    %vm83 = vcmask 244896
    %84 = vst.msk [vmem:[#allocation0] sm:$0x1] %vm83, %v82
    %s85 = scalar_lea.vmem %s0, 14
    %v86 = vld [vmem:[%s85] sm:$0x1]
    %87 = vrot.lane.b32.xlu0 %v86, 12
    %v88 = vpop.permute.xlu0 %87
    %vm89 = vcmask 179296
    %s90 = scalar_lea.vmem [#allocation0], 8
    %91 = vst.msk [vmem:[%s90] sm:$0x1] %vm89, %v88
    %s92 = scalar_lea.vmem %s0, 1
    %v93 = vld [vmem:[%s92] sm:$0x1]
    %94 = vrot.lane.b32.xlu0 %v93, 10
    %v95 = vpop.permute.xlu0 %94
    %vm96 = vcmask 162896
    %97 = vst.msk [vmem:[#allocation0] sm:$0x1] %vm96, %v95
    %s98 = scalar_lea.vmem %s0, 13
    %v99 = vld [vmem:[%s98] sm:$0x1]
    %100 = vrot.lane.b32.xlu0 %v99, 2
    %v101 = vpop.permute.xlu0 %100
    %vm102 = vcmask 97296
    %s103 = scalar_lea.vmem [#allocation0], 8
    %104 = vst.msk [vmem:[%s103] sm:$0x1] %vm102, %v101
    %s106 = sshllo.u32 0, 1
    %v108 = vld [vmem:[#allocation0] sm:%s106]
    %s109 = sshllo.u32 0, 1
    %110 = vst [vmem:[%s1] sm:%s109] %v108
    %s111 = scalar_lea.vmem [#allocation0], 8
    %v112 = vld [vmem:[%s111] sm:%s106]
    %s113 = sshllo.u32 0, 1
    %s114 = scalar_lea.vmem %s1, 1
    %115 = vst [vmem:[%s114] sm:%s113] %v112

// kernel: tile.23
$region0: #{tile.23}
  #allocation0 [shape = 's32[1]{0}', space=sflag, size = 0x4, scoped, tag = 'scoped memory for tile.23']
  %s0 = inlined_call_operand.vmem [shape: f32[16], index: 0, kind: input, shape index: {}]
  %s1 = inlined_call_operand.vmem [shape: f32[5,16], index: 1, kind: output, shape index: {}]
  // Predicated region
  $region2: #{tile.23} parent=0 // pred_check
    _
  $region3: #{tile.23} parent=0 // pred_check_branch
    %3 = sbr.rel (0) target = $region5
  $region4: #{tile.23} parent=0 // pred_region
    _
  $region5: #{tile.23} parent=0 // pred_fallthru
    _
  %v4 = vld [vmem:[%s0] ss:$0 sm:$0xff]
  %5 = vst [vmem:[%s1] sm:$0xff] %v4

// kernel: tile.24
$region0: #{tile.24}
  %s0 = inlined_call_operand.vmem [shape: f32[5,16], index: 0, kind: input, shape index: {}]
  %s1 = inlined_call_operand.vmem [shape: f32[1,80], index: 1, kind: output, shape index: {}]
  $region1: #{tile.24} parent=0
    #allocation0 [shape = 'u8[4096]{0}', space=vmem, size = 0x1000, scoped, tag = 'scoped mem for output reshape']
    %v2 = vld [vmem:[%s0] sm:$0x1]
    %vm3 = vcmask 130048
    %4 = vst.msk [vmem:[#allocation0] sm:$0x1] %vm3, %v2
    %s5 = scalar_lea.vmem %s0, 4
    %v6 = vld [vmem:[%s5] sm:$0x1]
    %7 = vrot.lane.b32.xlu0 %v6, 64
    %v8 = vpop.permute.xlu0 %7
    %vm9 = vcmask 654848
    %10 = vst.msk [vmem:[#allocation0] sm:$0x1] %vm9, %v8
    %s11 = scalar_lea.vmem %s0, 3
    %v12 = vld [vmem:[%s11] sm:$0x1]
    %13 = vrot.lane.b32.xlu0 %v12, 48
    %v14 = vpop.permute.xlu0 %13
    %vm15 = vcmask 523648
    %16 = vst.msk [vmem:[#allocation0] sm:$0x1] %vm15, %v14
    %s17 = scalar_lea.vmem %s0, 2
    %v18 = vld [vmem:[%s17] sm:$0x1]
    %19 = vrot.lane.b32.xlu0 %v18, 32
    %v20 = vpop.permute.xlu0 %19
    %vm21 = vcmask 392448
    %22 = vst.msk [vmem:[#allocation0] sm:$0x1] %vm21, %v20
    %s23 = scalar_lea.vmem %s0, 1
    %v24 = vld [vmem:[%s23] sm:$0x1]
    %25 = vrot.lane.b32.xlu0 %v24, 16
    %v26 = vpop.permute.xlu0 %25
    %vm27 = vcmask 261248
    %28 = vst.msk [vmem:[#allocation0] sm:$0x1] %vm27, %v26
    %s30 = sshllo.u32 0, 1
    %v32 = vld [vmem:[#allocation0] sm:%s30]
    %s33 = sshllo.u32 0, 1
    %34 = vst [vmem:[%s1] sm:%s33] %v32

// kernel: tile.28
$region0: #{tile.28}
  #allocation0 [shape = 's32[1]{0}', space=sflag, size = 0x4, scoped, tag = 'scoped memory for tile.28']
  %s0 = inlined_call_operand.vmem [shape: f32[32], index: 0, kind: input, shape index: {}]
  %s1 = inlined_call_operand.vmem [shape: f32[3,32], index: 1, kind: output, shape index: {}]
  // Predicated region
  $region2: #{tile.28} parent=0 // pred_check
    _
  $region3: #{tile.28} parent=0 // pred_check_branch
    %3 = sbr.rel (0) target = $region5
  $region4: #{tile.28} parent=0 // pred_region
    _
  $region5: #{tile.28} parent=0 // pred_fallthru
    _
  %v4 = vld [vmem:[%s0] ss:$0 sm:$0xff]
  %5 = vst [vmem:[%s1] sm:$0xf] %v4

// kernel: tile.29
$region0: #{tile.29}
  %s0 = inlined_call_operand.vmem [shape: f32[3,32], index: 0, kind: input, shape index: {}]
  %s1 = inlined_call_operand.vmem [shape: f32[1,96], index: 1, kind: output, shape index: {}]
  $region1: #{tile.29} parent=0
    #allocation0 [shape = 'u8[4096]{0}', space=vmem, size = 0x1000, scoped, tag = 'scoped mem for output reshape']
    #allocation1 [shape = 'u8[4096]{0}', space=vmem, size = 0x1000, scoped, tag = 'scoped mem for input reshape']
    %s3 = sshllo.u32 0, 4
    %v4 = vld [vmem:[%s0] sm:%s3]
    %5 = vst [vmem:[#allocation1] sm:%s3] %v4
    %v6 = vld [vmem:[#allocation1] sm:$0x1]
    %vm7 = vcmask 261120
    %8 = vst.msk [vmem:[#allocation0] sm:$0x1] %vm7, %v6
    %s9 = scalar_lea.vmem [#allocation1], 2
    %v10 = vld [vmem:[%s9] sm:$0x1]
    %11 = vrot.lane.b32.xlu0 %v10, 64
    %v12 = vpop.permute.xlu0 %11
    %vm13 = vcmask 785920
    %14 = vst.msk [vmem:[#allocation0] sm:$0x1] %vm13, %v12
    %s15 = scalar_lea.vmem [#allocation1], 1
    %v16 = vld [vmem:[%s15] sm:$0x1]
    %17 = vrot.lane.b32.xlu0 %v16, 32
    %v18 = vpop.permute.xlu0 %17
    %vm19 = vcmask 523520
    %20 = vst.msk [vmem:[#allocation0] sm:$0x1] %vm19, %v18
    %s22 = sshllo.u32 0, 1
    %v24 = vld [vmem:[#allocation0] sm:%s22]
    %s25 = sshllo.u32 0, 1
    %26 = vst [vmem:[%s1] sm:%s25] %v24

// kernel: pnet_forward.1
$region0: #{pnet_forward.1}
  #allocation0 [shape = 'u32[]', space=smem, size = 0x4, offset = 0x4, fixed_abs, tag = 'smem constant byte address 0x4 - core index']
  #allocation1 [shape = 'u32[144,128]{1,0:T(1,128)}', space=vmem, size = 0x12000, scoped, tag = 'internal scratch']
  %s0 = inlined_call_operand.vmem [shape: bf16[16,8,162], index: 0, kind: input, shape index: {}]
  %s1 = inlined_call_operand.vmem [shape: bf16[162,160], index: 1, kind: input, shape index: {}]
  %s2 = inlined_call_operand.vmem [shape: f32[1,160], index: 2, kind: input, shape index: {}]
  %s3 = inlined_call_operand.vmem [shape: bf16[3,140,80], index: 3, kind: input, shape index: {}]
  %s4 = inlined_call_operand.vmem [shape: f32[1,80], index: 4, kind: input, shape index: {}]
  %s5 = inlined_call_operand.vmem [shape: bf16[3,80,96], index: 5, kind: input, shape index: {}]
  %s6 = inlined_call_operand.vmem [shape: f32[1,96], index: 6, kind: input, shape index: {}]
  %s7 = inlined_call_operand.vmem [shape: bf16[96,24], index: 7, kind: input, shape index: {}]
  %s8 = inlined_call_operand.vmem [shape: f32[1,24], index: 8, kind: input, shape index: {}]
  %s9 = inlined_call_operand.vmem [shape: f32[3], index: 9, kind: input, shape index: {}]
  %s10 = inlined_call_operand.vmem [shape: f32[24,24], index: 10, kind: output, shape index: {}]
  %s11 = sld [smem:[#allocation0]]
  $region54: #{pnet_forward.1} parent=0
    _
  %s13 = ssub.s32 1, %s11
  %s14 = scalar_select 0, %s13, %s11
  $region1: #{pnet_forward.1} parent=0
    #allocation2 [shape = 'u8[512]{0}', space=smem, size = 0x200, scoped, tag = 'input window, operand 9, single buffered']
    #allocation3 [shape = 's32[1]{0}', space=sflag, size = 0x4, scoped, tag = 'scoped memory for pnet_forward.1']
    %15 = vsyncpa [#allocation3], 0
    // Predicated region
    $region2: #{pnet_forward.1} parent=1 // pred_check
      _
    $region3: #{pnet_forward.1} parent=1 // pred_check_branch
      %17 = sbr.rel (0) target = $region5
    $region4: #{pnet_forward.1} parent=1 // pred_region
      _
    $region5: #{pnet_forward.1} parent=1 // pred_fallthru
      _
    // Predicated region
    $region6: #{pnet_forward.1} parent=1 // pred_check
      _
    $region7: #{pnet_forward.1} parent=1 // pred_check_branch
      %19 = sbr.rel (0) target = $region9
    $region8: #{pnet_forward.1} parent=1 // pred_region
      _
    $region9: #{pnet_forward.1} parent=1 // pred_fallthru
      _
    // Predicated region
    $region10: #{pnet_forward.1} parent=1 // pred_check
      _
    $region11: #{pnet_forward.1} parent=1 // pred_check_branch
      %21 = sbr.rel (0) target = $region13
    $region12: #{pnet_forward.1} parent=1 // pred_region
      _
    $region13: #{pnet_forward.1} parent=1 // pred_fallthru
      _
    // Predicated region
    $region14: #{pnet_forward.1} parent=1 // pred_check
      _
    $region15: #{pnet_forward.1} parent=1 // pred_check_branch
      %23 = sbr.rel (0) target = $region17
    $region16: #{pnet_forward.1} parent=1 // pred_region
      _
    $region17: #{pnet_forward.1} parent=1 // pred_fallthru
      _
    // Predicated region
    $region18: #{pnet_forward.1} parent=1 // pred_check
      _
    $region19: #{pnet_forward.1} parent=1 // pred_check_branch
      %25 = sbr.rel (0) target = $region21
    $region20: #{pnet_forward.1} parent=1 // pred_region
      _
    $region21: #{pnet_forward.1} parent=1 // pred_fallthru
      _
    // Predicated region
    $region22: #{pnet_forward.1} parent=1 // pred_check
      _
    $region23: #{pnet_forward.1} parent=1 // pred_check_branch
      %27 = sbr.rel (0) target = $region25
    $region24: #{pnet_forward.1} parent=1 // pred_region
      _
    $region25: #{pnet_forward.1} parent=1 // pred_fallthru
      _
    // Predicated region
    $region26: #{pnet_forward.1} parent=1 // pred_check
      _
    $region27: #{pnet_forward.1} parent=1 // pred_check_branch
      %29 = sbr.rel (0) target = $region29
    $region28: #{pnet_forward.1} parent=1 // pred_region
      _
    $region29: #{pnet_forward.1} parent=1 // pred_fallthru
      _
    // Predicated region
    $region30: #{pnet_forward.1} parent=1 // pred_check
      _
    $region31: #{pnet_forward.1} parent=1 // pred_check_branch
      %31 = sbr.rel (0) target = $region33
    $region32: #{pnet_forward.1} parent=1 // pred_region
      _
    $region33: #{pnet_forward.1} parent=1 // pred_fallthru
      _
    // Predicated region
    $region34: #{pnet_forward.1} parent=1 // pred_check
      _
    $region35: #{pnet_forward.1} parent=1 // pred_check_branch
      %33 = sbr.rel (0) target = $region37
    $region36: #{pnet_forward.1} parent=1 // pred_region
      _
    $region37: #{pnet_forward.1} parent=1 // pred_fallthru
      _
    // Predicated region
    $region38: #{pnet_forward.1} parent=1 // pred_check
      _
    $region39: #{pnet_forward.1} parent=1 // pred_check_branch
      %35 = sbr.rel (0) target = $region41
    $region40: #{pnet_forward.1} parent=1 // pred_region
      %s37 = ssub.s32 16, 16
      %38 = vsyncadd [#allocation3], %s37
      %s40 = sshll.u32 %s9, 4
      %s41 = int_to_ptr.vmem [resolvable:$true] %s40
      %43 = dma.vmem_to_smem %s41, 16, [#allocation2], [#allocation3]
    $region41: #{pnet_forward.1} parent=1 // pred_fallthru
      _
    // Predicated region
    $region42: #{pnet_forward.1} parent=1 // pred_check
      _
    $region43: #{pnet_forward.1} parent=1 // pred_check_branch
      %45 = sbr.rel (0) target = $region45
    $region44: #{pnet_forward.1} parent=1 // pred_region
      %46 = dma.done [#allocation3], 16
    $region45: #{pnet_forward.1} parent=1 // pred_fallthru
      _
    %47 = sfence
    %v49 = vld [vmem:[%s0] sm:$0xff]
    %v50 = vld [vmem:[%s0 + $0x8] sm:$0xff]
    %v51 = vld [vmem:[%s0 + $0x10] sm:$0xff]
    %v52 = vld [vmem:[%s0 + $0x18] sm:$0xff]
    %v53 = vld [vmem:[%s0 + $0x20] sm:$0xff]
    %v54 = vld [vmem:[%s0 + $0x28] sm:$0xff]
    %v55 = vld [vmem:[%s0 + $0x30] sm:$0xff]
    %v56 = vld [vmem:[%s0 + $0x38] sm:$0xff]
    %v57 = vld [vmem:[%s0 + $0x40] sm:$0xff]
    %v58 = vld [vmem:[%s0 + $0x48] sm:$0xff]
    %v59 = vld [vmem:[%s0 + $0x50] sm:$0xff]
    %v60 = vld [vmem:[%s0 + $0x58] sm:$0xff]
    %v61 = vld [vmem:[%s0 + $0x60] sm:$0xff]
    %v62 = vld [vmem:[%s0 + $0x68] sm:$0xff]
    %v63 = vld [vmem:[%s0 + $0x70] sm:$0xff]
    %v64 = vld [vmem:[%s0 + $0x78] sm:$0xff]
    %v65 = vld [vmem:[%s1] sm:$0xff]
    %v66 = vld [vmem:[%s1 + $0x8] sm:$0xff]
    %v67 = vld [vmem:[%s1 + $0x10] sm:$0xff]
    %v68 = vld [vmem:[%s1 + $0x18] sm:$0xff]
    %v69 = vld [vmem:[%s1 + $0x20] sm:$0xff]
    %v70 = vld [vmem:[%s1 + $0x28] sm:$0xff]
    %v71 = vld [vmem:[%s1 + $0x30] sm:$0xff]
    %v72 = vld [vmem:[%s1 + $0x38] sm:$0xff]
    %v73 = vld [vmem:[%s1 + $0x40] sm:$0xff]
    %v74 = vld [vmem:[%s1 + $0x48] sm:$0xff]
    %v75 = vld [vmem:[%s1 + $0x50] sm:$0xff]
    %v76 = vld [vmem:[%s1 + $0x58] sm:$0xff]
    %v77 = vld [vmem:[%s1 + $0x60] sm:$0xff]
    %v78 = vld [vmem:[%s1 + $0x68] sm:$0xff]
    %v79 = vld [vmem:[%s1 + $0x70] sm:$0xff]
    %v80 = vld [vmem:[%s1 + $0x78] sm:$0xff]
    %v81 = vld [vmem:[%s1 + $0x80] sm:$0xff]
    %v82 = vld [vmem:[%s1 + $0x88] sm:$0xff]
    %v83 = vld [vmem:[%s1 + $0x90] sm:$0xff]
    %v84 = vld [vmem:[%s1 + $0x98] sm:$0xff]
    %v85 = vld [vmem:[%s1 + $0xa0] sm:$0x11]
    %v86 = vld [vmem:[%s2] sm:$0x3]
    %v88 = vlaneseq
    %v89 = vshrl.u32 %v88, 7
    %v90 = vsub.s32 0, %v89
    %v91 = vrot.slane %v86, %v90
    %v92 = vlaneseq
    %v93 = vshrl.u32 %v92, 7
    %v94 = vsub.s32 1, %v93
    %v95 = vrot.slane %v86, %v94
    %v114 = vunpack.c.l.b16 %v49
    %v115 = vunpack.c.h.b16 %v49
    %v116 = vunpack.c.l.b16 %v50
    %v117 = vunpack.c.h.b16 %v50
    %v118 = vunpack.c.l.b16 %v51
    %v119 = vunpack.c.h.b16 %v51
    %v120 = vunpack.c.l.b16 %v52
    %v121 = vunpack.c.h.b16 %v52
    %v122 = vunpack.c.l.b16 %v53
    %v123 = vunpack.c.h.b16 %v53
    %v124 = vunpack.c.l.b16 %v54
    %v125 = vunpack.c.h.b16 %v54
    %v126 = vunpack.c.l.b16 %v55
    %v127 = vunpack.c.h.b16 %v55
    %v128 = vunpack.c.l.b16 %v56
    %v129 = vunpack.c.h.b16 %v56
    %v130 = vunpack.c.l.b16 %v57
    %v131 = vunpack.c.h.b16 %v57
    %v132 = vunpack.c.l.b16 %v58
    %v133 = vunpack.c.h.b16 %v58
    %v134 = vunpack.c.l.b16 %v59
    %v135 = vunpack.c.h.b16 %v59
    %v136 = vunpack.c.l.b16 %v60
    %v137 = vunpack.c.h.b16 %v60
    %v138 = vunpack.c.l.b16 %v61
    %v139 = vunpack.c.h.b16 %v61
    %v140 = vunpack.c.l.b16 %v62
    %v141 = vunpack.c.h.b16 %v62
    %v142 = vunpack.c.l.b16 %v63
    %v143 = vunpack.c.h.b16 %v63
    %v144 = vunpack.c.l.b16 %v64
    %v145 = vunpack.c.h.b16 %v64
    %v146 = vpack.c.b16 %v116, %v114
    %v147 = vpack.c.b16 %v117, %v115
    %v148 = vpack.c.b16 %v120, %v118
    %v149 = vpack.c.b16 %v121, %v119
    %v150 = vpack.c.b16 %v124, %v122
    %v151 = vpack.c.b16 %v125, %v123
    %v152 = vpack.c.b16 %v128, %v126
    %v153 = vpack.c.b16 %v129, %v127
    %v154 = vpack.c.b16 %v132, %v130
    %v155 = vpack.c.b16 %v133, %v131
    %v156 = vpack.c.b16 %v136, %v134
    %v157 = vpack.c.b16 %v137, %v135
    %v158 = vpack.c.b16 %v140, %v138
    %v159 = vpack.c.b16 %v141, %v139
    %v160 = vpack.c.b16 %v144, %v142
    %v161 = vpack.c.b16 %v145, %v143
    %v191 = vunpack.c.l.b16 %v65
    %v192 = vunpack.c.h.b16 %v65
    %v193 = vunpack.c.l.b16 %v66
    %v194 = vunpack.c.h.b16 %v66
    %v195 = vunpack.c.l.b16 %v67
    %v196 = vunpack.c.h.b16 %v67
    %v197 = vunpack.c.l.b16 %v68
    %v198 = vunpack.c.h.b16 %v68
    %v199 = vunpack.c.l.b16 %v69
    %v200 = vunpack.c.h.b16 %v69
    %v201 = vunpack.c.l.b16 %v70
    %v202 = vunpack.c.h.b16 %v70
    %v203 = vunpack.c.l.b16 %v71
    %v204 = vunpack.c.h.b16 %v71
    %v205 = vunpack.c.l.b16 %v72
    %v206 = vunpack.c.h.b16 %v72
    %v207 = vunpack.c.l.b16 %v73
    %v208 = vunpack.c.h.b16 %v73
    %v209 = vunpack.c.l.b16 %v74
    %v210 = vunpack.c.h.b16 %v74
    %v211 = vunpack.c.l.b16 %v75
    %v212 = vunpack.c.h.b16 %v75
    %v213 = vunpack.c.l.b16 %v76
    %v214 = vunpack.c.h.b16 %v76
    %v215 = vunpack.c.l.b16 %v77
    %v216 = vunpack.c.h.b16 %v77
    %v217 = vunpack.c.l.b16 %v78
    %v218 = vunpack.c.h.b16 %v78
    %v219 = vunpack.c.l.b16 %v79
    %v220 = vunpack.c.h.b16 %v79
    %v221 = vunpack.c.l.b16 %v80
    %v222 = vunpack.c.h.b16 %v80
    %v223 = vunpack.c.l.b16 %v81
    %v224 = vunpack.c.h.b16 %v81
    %v225 = vunpack.c.l.b16 %v82
    %v226 = vunpack.c.h.b16 %v82
    %v227 = vunpack.c.l.b16 %v83
    %v228 = vunpack.c.h.b16 %v83
    %v229 = vunpack.c.l.b16 %v84
    %v230 = vunpack.c.h.b16 %v84
    %v231 = vunpack.c.l.b16 %v85
    %v232 = vunpack.c.h.b16 %v85
    %v233 = vpack.c.b16 %v193, %v191
    %v234 = vpack.c.b16 %v194, %v192
    %v235 = vpack.c.b16 %v197, %v195
    %v236 = vpack.c.b16 %v198, %v196
    %v237 = vpack.c.b16 %v201, %v199
    %v238 = vpack.c.b16 %v202, %v200
    %v239 = vpack.c.b16 %v205, %v203
    %v240 = vpack.c.b16 %v206, %v204
    %v241 = vpack.c.b16 %v209, %v207
    %v242 = vpack.c.b16 %v210, %v208
    %v243 = vpack.c.b16 %v213, %v211
    %v244 = vpack.c.b16 %v214, %v212
    %v245 = vpack.c.b16 %v217, %v215
    %v246 = vpack.c.b16 %v218, %v216
    %v247 = vpack.c.b16 %v221, %v219
    %v248 = vpack.c.b16 %v222, %v220
    %v249 = vpack.c.b16 %v225, %v223
    %v250 = vpack.c.b16 %v226, %v224
    %v251 = vpack.c.b16 %v229, %v227
    %v252 = vpack.c.b16 %v230, %v228
    %v253 = vpack.c.b16 %v231, %v231
    %v254 = vpack.c.b16 %v232, %v232
    %vm275 = vcmask 277504
    %v277 = vsel %vm275, %v147, 0
    %v280 = vsel %vm275, %v149, 0
    %v283 = vsel %vm275, %v151, 0
    %v286 = vsel %vm275, %v153, 0
    %v289 = vsel %vm275, %v155, 0
    %v292 = vsel %vm275, %v157, 0
    %v295 = vsel %vm275, %v159, 0
    %v298 = vsel %vm275, %v161, 0
    %vm300 = vcmask 1040384
    %v302 = vsel %vm300, %v253, 0
    %v305 = vsel %vm300, %v254, 0
    %307 = vmatprep.subr.bf16.mxu0 %v234
    %308 = vmatpush1.bf16.msra.mxu0 %v233
    %309 = vmatprep.subr.bf16.mxu0 %v236
    %310 = vmatpush1.bf16.msra.mxu0 %v235
    %311 = vmatprep.subr.bf16.mxu0 %v238
    %312 = vmatpush1.bf16.msra.mxu0 %v237
    %313 = vmatprep.subr.bf16.mxu0 %v240
    %314 = vmatpush1.bf16.msra.mxu0 %v239
    %315 = vmatprep.subr.bf16.mxu0 %v242
    %316 = vmatpush1.bf16.msra.mxu0 %v241
    %317 = vmatprep.subr.bf16.mxu0 %v244
    %318 = vmatpush1.bf16.msra.mxu0 %v243
    %319 = vmatprep.subr.bf16.mxu0 %v246
    %320 = vmatpush1.bf16.msra.mxu0 %v245
    %321 = vmatprep.subr.bf16.mxu0 %v248
    %322 = vmatpush1.bf16.msra.mxu0 %v247
    %323 = vmatprep.subr.bf16.mxu0 %v250
    %324 = vmatpush1.bf16.msra.mxu0 %v249
    %325 = vmatprep.subr.bf16.mxu0 %v252
    %326 = vmatpush1.bf16.msra.mxu0 %v251
    %327 = vmatprep.subr.bf16.mxu0 %v305
    %328 = vmatpush1.bf16.msra.mxu0 %v302
    %329 = vmatprep.subr.bf16.mxu0 0
    %330 = vmatpush1.bf16.msra.mxu0 0
    %331 = vmatprep.subr.bf16.mxu0 0
    %332 = vmatpush1.bf16.msra.mxu0 0
    %333 = vmatprep.subr.bf16.mxu0 0
    %334 = vmatpush1.bf16.msra.mxu0 0
    %335 = vmatprep.subr.bf16.mxu0 0
    %336 = vmatpush1.bf16.msra.mxu0 0
    %337 = vmatprep.subr.bf16.mxu0 0
    %338 = vmatpush1.bf16.msra.mxu0 0
    %339 = vmatprep.mubr.bf16.mxu0 %v277
    %340 = vmatmul.mubr.bf16.gmra.mrb[0].mxu0 %v146
    %v341 = vpop.f32.mrb[0].mxu0
    %v342 = vadd.f32 %v91, %v341
    %v343 = vpop.f32.mrb[0].mxu0
    %v344 = vadd.f32 %v95, %v343
    %v345 = vpop.f32.mrb[0].mxu0
    %v346 = vadd.f32 %v91, %v345
    %v347 = vpop.f32.mrb[0].mxu0
    %v348 = vadd.f32 %v95, %v347
    %349 = vmatprep.mubr.bf16.mxu0 %v280
    %350 = vmatmul.mubr.bf16.gmra.mrb[0].mxu0 %v148
    %v351 = vpop.f32.mrb[0].mxu0
    %v352 = vadd.f32 %v91, %v351
    %v353 = vpop.f32.mrb[0].mxu0
    %v354 = vadd.f32 %v95, %v353
    %v355 = vpop.f32.mrb[0].mxu0
    %v356 = vadd.f32 %v91, %v355
    %v357 = vpop.f32.mrb[0].mxu0
    %v358 = vadd.f32 %v95, %v357
    %359 = vmatprep.mubr.bf16.mxu0 %v283
    %360 = vmatmul.mubr.bf16.gmra.mrb[0].mxu0 %v150
    %v361 = vpop.f32.mrb[0].mxu0
    %v362 = vadd.f32 %v91, %v361
    %v363 = vpop.f32.mrb[0].mxu0
    %v364 = vadd.f32 %v95, %v363
    %v365 = vpop.f32.mrb[0].mxu0
    %v366 = vadd.f32 %v91, %v365
    %v367 = vpop.f32.mrb[0].mxu0
    %v368 = vadd.f32 %v95, %v367
    %369 = vmatprep.mubr.bf16.mxu0 %v286
    %370 = vmatmul.mubr.bf16.gmra.mrb[0].mxu0 %v152
    %v371 = vpop.f32.mrb[0].mxu0
    %v372 = vadd.f32 %v91, %v371
    %v373 = vpop.f32.mrb[0].mxu0
    %v374 = vadd.f32 %v95, %v373
    %v375 = vpop.f32.mrb[0].mxu0
    %v376 = vadd.f32 %v91, %v375
    %v377 = vpop.f32.mrb[0].mxu0
    %v378 = vadd.f32 %v95, %v377
    %379 = vmatprep.mubr.bf16.mxu0 %v289
    %380 = vmatmul.mubr.bf16.gmra.mrb[0].mxu0 %v154
    %v381 = vpop.f32.mrb[0].mxu0
    %v382 = vadd.f32 %v91, %v381
    %v383 = vpop.f32.mrb[0].mxu0
    %v384 = vadd.f32 %v95, %v383
    %v385 = vpop.f32.mrb[0].mxu0
    %v386 = vadd.f32 %v91, %v385
    %v387 = vpop.f32.mrb[0].mxu0
    %v388 = vadd.f32 %v95, %v387
    %389 = vmatprep.mubr.bf16.mxu0 %v292
    %390 = vmatmul.mubr.bf16.gmra.mrb[0].mxu0 %v156
    %v391 = vpop.f32.mrb[0].mxu0
    %v392 = vadd.f32 %v91, %v391
    %v393 = vpop.f32.mrb[0].mxu0
    %v394 = vadd.f32 %v95, %v393
    %v395 = vpop.f32.mrb[0].mxu0
    %v396 = vadd.f32 %v91, %v395
    %v397 = vpop.f32.mrb[0].mxu0
    %v398 = vadd.f32 %v95, %v397
    %399 = vmatprep.mubr.bf16.mxu0 %v295
    %400 = vmatmul.mubr.bf16.gmra.mrb[0].mxu0 %v158
    %v401 = vpop.f32.mrb[0].mxu0
    %v402 = vadd.f32 %v91, %v401
    %v403 = vpop.f32.mrb[0].mxu0
    %v404 = vadd.f32 %v95, %v403
    %v405 = vpop.f32.mrb[0].mxu0
    %v406 = vadd.f32 %v91, %v405
    %v407 = vpop.f32.mrb[0].mxu0
    %v408 = vadd.f32 %v95, %v407
    %409 = vmatprep.mubr.bf16.mxu0 %v298
    %410 = vmatmul.mubr.bf16.gmra.mrb[0].mxu0 %v160
    %v411 = vpop.f32.mrb[0].mxu0
    %v412 = vadd.f32 %v91, %v411
    %v413 = vpop.f32.mrb[0].mxu0
    %v414 = vadd.f32 %v95, %v413
    %v415 = vpop.f32.mrb[0].mxu0
    %v416 = vadd.f32 %v91, %v415
    %v417 = vpop.f32.mrb[0].mxu0
    %v418 = vadd.f32 %v95, %v417
    %419 = vdwg.mxu0
    %vm420 = vcmp.ge.f32.partialorder %v342, 0.0
    %vm421 = vcmp.ge.f32.partialorder %v344, 0.0
    %vm422 = vcmp.ge.f32.partialorder %v346, 0.0
    %vm423 = vcmp.ge.f32.partialorder %v348, 0.0
    %vm424 = vcmp.ge.f32.partialorder %v352, 0.0
    %vm425 = vcmp.ge.f32.partialorder %v354, 0.0
    %vm426 = vcmp.ge.f32.partialorder %v356, 0.0
    %vm427 = vcmp.ge.f32.partialorder %v358, 0.0
    %vm428 = vcmp.ge.f32.partialorder %v362, 0.0
    %vm429 = vcmp.ge.f32.partialorder %v364, 0.0
    %vm430 = vcmp.ge.f32.partialorder %v366, 0.0
    %vm431 = vcmp.ge.f32.partialorder %v368, 0.0
    %vm432 = vcmp.ge.f32.partialorder %v372, 0.0
    %vm433 = vcmp.ge.f32.partialorder %v374, 0.0
    %vm434 = vcmp.ge.f32.partialorder %v376, 0.0
    %vm435 = vcmp.ge.f32.partialorder %v378, 0.0
    %vm436 = vcmp.ge.f32.partialorder %v382, 0.0
    %vm437 = vcmp.ge.f32.partialorder %v384, 0.0
    %vm438 = vcmp.ge.f32.partialorder %v386, 0.0
    %vm439 = vcmp.ge.f32.partialorder %v388, 0.0
    %vm440 = vcmp.ge.f32.partialorder %v392, 0.0
    %vm441 = vcmp.ge.f32.partialorder %v394, 0.0
    %vm442 = vcmp.ge.f32.partialorder %v396, 0.0
    %vm443 = vcmp.ge.f32.partialorder %v398, 0.0
    %vm444 = vcmp.ge.f32.partialorder %v402, 0.0
    %vm445 = vcmp.ge.f32.partialorder %v404, 0.0
    %vm446 = vcmp.ge.f32.partialorder %v406, 0.0
    %vm447 = vcmp.ge.f32.partialorder %v408, 0.0
    %vm448 = vcmp.ge.f32.partialorder %v412, 0.0
    %vm449 = vcmp.ge.f32.partialorder %v414, 0.0
    %vm450 = vcmp.ge.f32.partialorder %v416, 0.0
    %vm451 = vcmp.ge.f32.partialorder %v418, 0.0
    %s452 = sld [smem:[#allocation2]]
    %v453 = vstv %s452
    %v454 = vmul.f32 %v453, %v342
    %v455 = vmul.f32 %v453, %v344
    %v456 = vmul.f32 %v453, %v346
    %v457 = vmul.f32 %v453, %v348
    %v458 = vmul.f32 %v453, %v352
    %v459 = vmul.f32 %v453, %v354
    %v460 = vmul.f32 %v453, %v356
    %v461 = vmul.f32 %v453, %v358
    %v462 = vmul.f32 %v453, %v362
    %v463 = vmul.f32 %v453, %v364
    %v464 = vmul.f32 %v453, %v366
    %v465 = vmul.f32 %v453, %v368
    %v466 = vmul.f32 %v453, %v372
    %v467 = vmul.f32 %v453, %v374
    %v468 = vmul.f32 %v453, %v376
    %v469 = vmul.f32 %v453, %v378
    %v470 = vmul.f32 %v453, %v382
    %v471 = vmul.f32 %v453, %v384
    %v472 = vmul.f32 %v453, %v386
    %v473 = vmul.f32 %v453, %v388
    %v474 = vmul.f32 %v453, %v392
    %v475 = vmul.f32 %v453, %v394
    %v476 = vmul.f32 %v453, %v396
    %v477 = vmul.f32 %v453, %v398
    %v478 = vmul.f32 %v453, %v402
    %v479 = vmul.f32 %v453, %v404
    %v480 = vmul.f32 %v453, %v406
    %v481 = vmul.f32 %v453, %v408
    %v482 = vmul.f32 %v453, %v412
    %v483 = vmul.f32 %v453, %v414
    %v484 = vmul.f32 %v453, %v416
    %v485 = vmul.f32 %v453, %v418
    %v486 = vsel %vm420, %v342, %v454
    %v487 = vsel %vm421, %v344, %v455
    %v488 = vsel %vm422, %v346, %v456
    %v489 = vsel %vm423, %v348, %v457
    %v490 = vsel %vm424, %v352, %v458
    %v491 = vsel %vm425, %v354, %v459
    %v492 = vsel %vm426, %v356, %v460
    %v493 = vsel %vm427, %v358, %v461
    %v494 = vsel %vm428, %v362, %v462
    %v495 = vsel %vm429, %v364, %v463
    %v496 = vsel %vm430, %v366, %v464
    %v497 = vsel %vm431, %v368, %v465
    %v498 = vsel %vm432, %v372, %v466
    %v499 = vsel %vm433, %v374, %v467
    %v500 = vsel %vm434, %v376, %v468
    %v501 = vsel %vm435, %v378, %v469
    %v502 = vsel %vm436, %v382, %v470
    %v503 = vsel %vm437, %v384, %v471
    %v504 = vsel %vm438, %v386, %v472
    %v505 = vsel %vm439, %v388, %v473
    %v506 = vsel %vm440, %v392, %v474
    %v507 = vsel %vm441, %v394, %v475
    %v508 = vsel %vm442, %v396, %v476
    %v509 = vsel %vm443, %v398, %v477
    %v510 = vsel %vm444, %v402, %v478
    %v511 = vsel %vm445, %v404, %v479
    %v512 = vsel %vm446, %v406, %v480
    %v513 = vsel %vm447, %v408, %v481
    %v514 = vsel %vm448, %v412, %v482
    %v515 = vsel %vm449, %v414, %v483
    %v516 = vsel %vm450, %v416, %v484
    %v517 = vsel %vm451, %v418, %v485
    %v518 = vpack.c.bf16 %v488, %v486
    %v519 = vpack.c.bf16 %v489, %v487
    %v520 = vpack.c.bf16 %v492, %v490
    %v521 = vpack.c.bf16 %v493, %v491
    %v522 = vpack.c.bf16 %v496, %v494
    %v523 = vpack.c.bf16 %v497, %v495
    %v524 = vpack.c.bf16 %v500, %v498
    %v525 = vpack.c.bf16 %v501, %v499
    %v526 = vpack.c.bf16 %v504, %v502
    %v527 = vpack.c.bf16 %v505, %v503
    %v528 = vpack.c.bf16 %v508, %v506
    %v529 = vpack.c.bf16 %v509, %v507
    %v530 = vpack.c.bf16 %v512, %v510
    %v531 = vpack.c.bf16 %v513, %v511
    %v532 = vpack.c.bf16 %v516, %v514
    %v533 = vpack.c.bf16 %v517, %v515
    %550 = vrot.lane.b32.xlu0 %v518, 118
    %v551 = vpop.permute.xlu0 %550
    %552 = vrot.lane.b32.xlu0 %v519, 118
    %v553 = vpop.permute.xlu0 %552
    %554 = vrot.lane.b32.xlu0 %v520, 118
    %v555 = vpop.permute.xlu0 %554
    %556 = vrot.lane.b32.xlu0 %v521, 118
    %v557 = vpop.permute.xlu0 %556
    %558 = vrot.lane.b32.xlu0 %v522, 118
    %v559 = vpop.permute.xlu0 %558
    %560 = vrot.lane.b32.xlu0 %v523, 118
    %v561 = vpop.permute.xlu0 %560
    %562 = vrot.lane.b32.xlu0 %v524, 118
    %v563 = vpop.permute.xlu0 %562
    %564 = vrot.lane.b32.xlu0 %v525, 118
    %v565 = vpop.permute.xlu0 %564
    %566 = vrot.lane.b32.xlu0 %v526, 118
    %v567 = vpop.permute.xlu0 %566
    %568 = vrot.lane.b32.xlu0 %v527, 118
    %v569 = vpop.permute.xlu0 %568
    %570 = vrot.lane.b32.xlu0 %v528, 118
    %v571 = vpop.permute.xlu0 %570
    %572 = vrot.lane.b32.xlu0 %v529, 118
    %v573 = vpop.permute.xlu0 %572
    %574 = vrot.lane.b32.xlu0 %v530, 118
    %v575 = vpop.permute.xlu0 %574
    %576 = vrot.lane.b32.xlu0 %v531, 118
    %v577 = vpop.permute.xlu0 %576
    %578 = vrot.lane.b32.xlu0 %v532, 118
    %v579 = vpop.permute.xlu0 %578
    %580 = vrot.lane.b32.xlu0 %v533, 118
    %v581 = vpop.permute.xlu0 %580
    %vm582 = vcmask 965632
    %v583 = vsel %vm582, %v551, %v553
    %v584 = vsel %vm582, %v555, %v557
    %v585 = vsel %vm582, %v559, %v561
    %v586 = vsel %vm582, %v563, %v565
    %v587 = vsel %vm582, %v567, %v569
    %v588 = vsel %vm582, %v571, %v573
    %v589 = vsel %vm582, %v575, %v577
    %v590 = vsel %vm582, %v579, %v581
    %v607 = vmax.bf16 %v518, %v583
    %v608 = vmax.bf16 %v519, %v553
    %v609 = vmax.bf16 %v520, %v584
    %v610 = vmax.bf16 %v521, %v557
    %v611 = vmax.bf16 %v522, %v585
    %v612 = vmax.bf16 %v523, %v561
    %v613 = vmax.bf16 %v524, %v586
    %v614 = vmax.bf16 %v525, %v565
    %v615 = vmax.bf16 %v526, %v587
    %v616 = vmax.bf16 %v527, %v569
    %v617 = vmax.bf16 %v528, %v588
    %v618 = vmax.bf16 %v529, %v573
    %v619 = vmax.bf16 %v530, %v589
    %v620 = vmax.bf16 %v531, %v577
    %v621 = vmax.bf16 %v532, %v590
    %v622 = vmax.bf16 %v533, %v581
    %623 = vrot.lane.b32.xlu0 %v518, 108
    %v624 = vpop.permute.xlu0 %623
    %625 = vrot.lane.b32.xlu0 %v519, 108
    %v626 = vpop.permute.xlu0 %625
    %627 = vrot.lane.b32.xlu0 %v520, 108
    %v628 = vpop.permute.xlu0 %627
    %629 = vrot.lane.b32.xlu0 %v521, 108
    %v630 = vpop.permute.xlu0 %629
    %631 = vrot.lane.b32.xlu0 %v522, 108
    %v632 = vpop.permute.xlu0 %631
    %633 = vrot.lane.b32.xlu0 %v523, 108
    %v634 = vpop.permute.xlu0 %633
    %635 = vrot.lane.b32.xlu0 %v524, 108
    %v636 = vpop.permute.xlu0 %635
    %637 = vrot.lane.b32.xlu0 %v525, 108
    %v638 = vpop.permute.xlu0 %637
    %639 = vrot.lane.b32.xlu0 %v526, 108
    %v640 = vpop.permute.xlu0 %639
    %641 = vrot.lane.b32.xlu0 %v527, 108
    %v642 = vpop.permute.xlu0 %641
    %643 = vrot.lane.b32.xlu0 %v528, 108
    %v644 = vpop.permute.xlu0 %643
    %645 = vrot.lane.b32.xlu0 %v529, 108
    %v646 = vpop.permute.xlu0 %645
    %647 = vrot.lane.b32.xlu0 %v530, 108
    %v648 = vpop.permute.xlu0 %647
    %649 = vrot.lane.b32.xlu0 %v531, 108
    %v650 = vpop.permute.xlu0 %649
    %651 = vrot.lane.b32.xlu0 %v532, 108
    %v652 = vpop.permute.xlu0 %651
    %653 = vrot.lane.b32.xlu0 %v533, 108
    %v654 = vpop.permute.xlu0 %653
    %vm655 = vcmask 883712
    %v656 = vsel %vm655, %v624, %v626
    %v657 = vsel %vm655, %v628, %v630
    %v658 = vsel %vm655, %v632, %v634
    %v659 = vsel %vm655, %v636, %v638
    %v660 = vsel %vm655, %v640, %v642
    %v661 = vsel %vm655, %v644, %v646
    %v662 = vsel %vm655, %v648, %v650
    %v663 = vsel %vm655, %v652, %v654
    %v680 = vmax.bf16 %v607, %v656
    %v681 = vmax.bf16 %v608, %v626
    %v682 = vmax.bf16 %v609, %v657
    %v683 = vmax.bf16 %v610, %v630
    %v684 = vmax.bf16 %v611, %v658
    %v685 = vmax.bf16 %v612, %v634
    %v686 = vmax.bf16 %v613, %v659
    %v687 = vmax.bf16 %v614, %v638
    %v688 = vmax.bf16 %v615, %v660
    %v689 = vmax.bf16 %v616, %v642
    %v690 = vmax.bf16 %v617, %v661
    %v691 = vmax.bf16 %v618, %v646
    %v692 = vmax.bf16 %v619, %v662
    %v693 = vmax.bf16 %v620, %v650
    %v694 = vmax.bf16 %v621, %v663
    %v695 = vmax.bf16 %v622, %v654
    %vm712 = vcmask 1043456
    %v713 = vrot.slane %v680, 4
    %v714 = vrot.slane %v682, 4
    %v715 = vsel %vm712, %v713, %v714
    %v716 = vrot.slane %v681, 4
    %v717 = vrot.slane %v683, 4
    %v718 = vsel %vm712, %v716, %v717
    %v719 = vrot.slane %v684, 4
    %v720 = vsel %vm712, %v714, %v719
    %v721 = vrot.slane %v685, 4
    %v722 = vsel %vm712, %v717, %v721
    %v723 = vrot.slane %v686, 4
    %v724 = vsel %vm712, %v719, %v723
    %v725 = vrot.slane %v687, 4
    %v726 = vsel %vm712, %v721, %v725
    %v727 = vrot.slane %v688, 4
    %v728 = vsel %vm712, %v723, %v727
    %v729 = vrot.slane %v689, 4
    %v730 = vsel %vm712, %v725, %v729
    %v731 = vrot.slane %v690, 4
    %v732 = vsel %vm712, %v727, %v731
    %v733 = vrot.slane %v691, 4
    %v734 = vsel %vm712, %v729, %v733
    %v735 = vrot.slane %v692, 4
    %v736 = vsel %vm712, %v731, %v735
    %v737 = vrot.slane %v693, 4
    %v738 = vsel %vm712, %v733, %v737
    %v739 = vrot.slane %v694, 4
    %v740 = vsel %vm712, %v735, %v739
    %v741 = vrot.slane %v695, 4
    %v742 = vsel %vm712, %v737, %v741
    %v757 = vmax.bf16 %v680, %v715
    %v758 = vmax.bf16 %v681, %v718
    %v759 = vmax.bf16 %v682, %v720
    %v760 = vmax.bf16 %v683, %v722
    %v761 = vmax.bf16 %v684, %v724
    %v762 = vmax.bf16 %v685, %v726
    %v763 = vmax.bf16 %v686, %v728
    %v764 = vmax.bf16 %v687, %v730
    %v765 = vmax.bf16 %v688, %v732
    %v766 = vmax.bf16 %v689, %v734
    %v767 = vmax.bf16 %v690, %v736
    %v768 = vmax.bf16 %v691, %v738
    %v769 = vmax.bf16 %v692, %v740
    %v770 = vmax.bf16 %v693, %v742
    %v771 = vmax.bf16 %v757, %v682
    %v772 = vmax.bf16 %v758, %v683
    %v773 = vmax.bf16 %v759, %v684
    %v774 = vmax.bf16 %v760, %v685
    %v775 = vmax.bf16 %v761, %v686
    %v776 = vmax.bf16 %v762, %v687
    %v777 = vmax.bf16 %v763, %v688
    %v778 = vmax.bf16 %v764, %v689
    %v779 = vmax.bf16 %v765, %v690
    %v780 = vmax.bf16 %v766, %v691
    %v781 = vmax.bf16 %v767, %v692
    %v782 = vmax.bf16 %v768, %v693
    %v783 = vmax.bf16 %v769, %v694
    %v784 = vmax.bf16 %v770, %v695
    %v787 = vrot.slane %v773, 4
    %v788 = vrot.slane %v774, 4
    %v791 = vrot.slane %v777, 4
    %v792 = vrot.slane %v778, 4
    %v795 = vrot.slane %v781, 4
    %v796 = vrot.slane %v782, 4
    %vm797 = vcmask 1043456
    %v800 = vsel %vm797, %v771, %v787
    %v804 = vsel %vm797, %v772, %v788
    %v807 = vsel %vm797, %v775, %v791
    %v811 = vsel %vm797, %v776, %v792
    %v814 = vsel %vm797, %v779, %v795
    %v818 = vsel %vm797, %v780, %v796
    %v819 = vld [vmem:[%s3] sm:$0xf]
    %v820 = vld [vmem:[%s3 + $0x4] sm:$0xf]
    %v821 = vld [vmem:[%s3 + $0x8] sm:$0xf]
    %v822 = vld [vmem:[%s3 + $0xc] sm:$0xf]
    %v823 = vld [vmem:[%s3 + $0x10] sm:$0xf]
    %v824 = vld [vmem:[%s3 + $0x14] sm:$0xf]
    %v825 = vld [vmem:[%s3 + $0x18] sm:$0xf]
    %v826 = vld [vmem:[%s3 + $0x1c] sm:$0xf]
    %v827 = vld [vmem:[%s3 + $0x20] sm:$0xf]
    %v828 = vld [vmem:[%s3 + $0x24] sm:$0xf]
    %v829 = vld [vmem:[%s3 + $0x28] sm:$0xf]
    %v830 = vld [vmem:[%s3 + $0x2c] sm:$0xf]
    %v831 = vld [vmem:[%s3 + $0x30] sm:$0xf]
    %v832 = vld [vmem:[%s3 + $0x34] sm:$0xf]
    %v833 = vld [vmem:[%s3 + $0x38] sm:$0xf]
    %v834 = vld [vmem:[%s3 + $0x3c] sm:$0xf]
    %v835 = vld [vmem:[%s3 + $0x40] sm:$0xf]
    %v836 = vld [vmem:[%s3 + $0x44] sm:$0x3]
    %s837 = scalar_lea.vmem %s3, 72
    %v838 = vld [vmem:[%s837] sm:$0xf]
    %v839 = vld [vmem:[%s837 + $0x4] sm:$0xf]
    %v840 = vld [vmem:[%s837 + $0x8] sm:$0xf]
    %v841 = vld [vmem:[%s837 + $0xc] sm:$0xf]
    %v842 = vld [vmem:[%s837 + $0x10] sm:$0xf]
    %v843 = vld [vmem:[%s837 + $0x14] sm:$0xf]
    %v844 = vld [vmem:[%s837 + $0x18] sm:$0xf]
    %v845 = vld [vmem:[%s837 + $0x1c] sm:$0xf]
    %v846 = vld [vmem:[%s837 + $0x20] sm:$0xf]
    %v847 = vld [vmem:[%s837 + $0x24] sm:$0xf]
    %v848 = vld [vmem:[%s837 + $0x28] sm:$0xf]
    %v849 = vld [vmem:[%s837 + $0x2c] sm:$0xf]
    %v850 = vld [vmem:[%s837 + $0x30] sm:$0xf]
    %v851 = vld [vmem:[%s837 + $0x34] sm:$0xf]
    %v852 = vld [vmem:[%s837 + $0x38] sm:$0xf]
    %v853 = vld [vmem:[%s837 + $0x3c] sm:$0xf]
    %v854 = vld [vmem:[%s837 + $0x40] sm:$0xf]
    %v855 = vld [vmem:[%s837 + $0x44] sm:$0x3]
    %v862 = vrot.slane %v800, 4
    %v863 = vrot.slane %v807, 4
    %v864 = vsel %vm712, %v862, %v863
    %v865 = vrot.slane %v804, 4
    %v866 = vrot.slane %v811, 4
    %v867 = vsel %vm712, %v865, %v866
    %v868 = vrot.slane %v814, 4
    %v869 = vsel %vm712, %v863, %v868
    %v870 = vrot.slane %v818, 4
    %v871 = vsel %vm712, %v866, %v870
    %v893 = vunpack.c.l.b16 %v838
    %v894 = vunpack.c.l.b16 %v839
    %v895 = vunpack.c.l.b16 %v840
    %v896 = vunpack.c.l.b16 %v841
    %v897 = vunpack.c.l.b16 %v842
    %v898 = vunpack.c.l.b16 %v843
    %v899 = vunpack.c.l.b16 %v844
    %v900 = vunpack.c.l.b16 %v845
    %v901 = vunpack.c.l.b16 %v846
    %v902 = vunpack.c.l.b16 %v847
    %v903 = vunpack.c.l.b16 %v848
    %v904 = vunpack.c.l.b16 %v849
    %v905 = vunpack.c.l.b16 %v850
    %v906 = vunpack.c.l.b16 %v851
    %v907 = vunpack.c.l.b16 %v852
    %v908 = vunpack.c.l.b16 %v853
    %v909 = vunpack.c.l.b16 %v854
    %v910 = vunpack.c.l.b16 %v855
    %v911 = vpack.c.b16 %v894, %v893
    %v912 = vpack.c.b16 %v896, %v895
    %v913 = vpack.c.b16 %v898, %v897
    %v914 = vpack.c.b16 %v900, %v899
    %v915 = vpack.c.b16 %v902, %v901
    %v916 = vpack.c.b16 %v904, %v903
    %v917 = vpack.c.b16 %v906, %v905
    %v918 = vpack.c.b16 %v908, %v907
    %v919 = vpack.c.b16 %v910, %v909
    %vm928 = vcmask 97280
    %v930 = vsel %vm928, %v867, 0
    %v933 = vsel %vm928, %v871, 0
    %v936 = vsel %vm928, %v870, 0
    %vm938 = vcmask 1045504
    %v940 = vsel %vm938, %v919, 0
    %942 = vmatprep.subr.bf16.mxu0 0
    %943 = vmatpush1.bf16.msra.mxu0 %v911
    %944 = vmatprep.subr.bf16.mxu0 0
    %945 = vmatpush1.bf16.msra.mxu0 %v912
    %946 = vmatprep.subr.bf16.mxu0 0
    %947 = vmatpush1.bf16.msra.mxu0 %v913
    %948 = vmatprep.subr.bf16.mxu0 0
    %949 = vmatpush1.bf16.msra.mxu0 %v914
    %950 = vmatprep.subr.bf16.mxu0 0
    %951 = vmatpush1.bf16.msra.mxu0 %v915
    %952 = vmatprep.subr.bf16.mxu0 0
    %953 = vmatpush1.bf16.msra.mxu0 %v916
    %954 = vmatprep.subr.bf16.mxu0 0
    %955 = vmatpush1.bf16.msra.mxu0 %v917
    %956 = vmatprep.subr.bf16.mxu0 0
    %957 = vmatpush1.bf16.msra.mxu0 %v918
    %958 = vmatprep.subr.bf16.mxu0 0
    %959 = vmatpush1.bf16.msra.mxu0 %v940
    %960 = vmatprep.subr.bf16.mxu0 0
    %961 = vmatpush1.bf16.msra.mxu0 0
    %962 = vmatprep.subr.bf16.mxu0 0
    %963 = vmatpush1.bf16.msra.mxu0 0
    %964 = vmatprep.subr.bf16.mxu0 0
    %965 = vmatpush1.bf16.msra.mxu0 0
    %966 = vmatprep.subr.bf16.mxu0 0
    %967 = vmatpush1.bf16.msra.mxu0 0
    %968 = vmatprep.subr.bf16.mxu0 0
    %969 = vmatpush1.bf16.msra.mxu0 0
    %970 = vmatprep.subr.bf16.mxu0 0
    %971 = vmatpush1.bf16.msra.mxu0 0
    %972 = vmatprep.subr.bf16.mxu0 0
    %973 = vmatpush1.bf16.msra.mxu0 0
    %974 = vmatprep.mubr.bf16.mxu0 %v930
    %975 = vmatmul.mubr.bf16.gmra.mrb[0].mxu0 %v864
    %v976 = vpop.f32.mrb[0].mxu0
    %v977 = vadd.f32 0.0, %v976
    %v978 = vpop.f32.mrb[0].mxu0
    %v979 = vpop.f32.mrb[0].mxu0
    %v980 = vadd.f32 0.0, %v979
    %v981 = vpop.f32.mrb[0].mxu0
    %982 = vmatprep.mubr.bf16.mxu0 %v933
    %983 = vmatmul.mubr.bf16.gmra.mrb[0].mxu0 %v869
    %v984 = vpop.f32.mrb[0].mxu0
    %v985 = vadd.f32 0.0, %v984
    %v986 = vpop.f32.mrb[0].mxu0
    %v987 = vpop.f32.mrb[0].mxu0
    %v988 = vadd.f32 0.0, %v987
    %v989 = vpop.f32.mrb[0].mxu0
    %990 = vmatprep.mubr.bf16.mxu0 %v936
    %991 = vmatmul.mubr.bf16.gmra.mrb[0].mxu0 %v868
    %v992 = vpop.f32.mrb[0].mxu0
    %v993 = vadd.f32 0.0, %v992
    %v994 = vpop.f32.mrb[0].mxu0
    %v995 = vpop.f32.mrb[0].mxu0
    %v996 = vpop.f32.mrb[0].mxu0
    %997 = vdwg.mxu0
    %v1016 = vunpack.c.l.b16 %v819
    %v1017 = vunpack.c.l.b16 %v820
    %v1018 = vunpack.c.l.b16 %v821
    %v1019 = vunpack.c.l.b16 %v822
    %v1020 = vunpack.c.l.b16 %v823
    %v1021 = vunpack.c.l.b16 %v824
    %v1022 = vunpack.c.l.b16 %v825
    %v1023 = vunpack.c.l.b16 %v826
    %v1024 = vunpack.c.l.b16 %v827
    %v1025 = vunpack.c.l.b16 %v828
    %v1026 = vunpack.c.l.b16 %v829
    %v1027 = vunpack.c.l.b16 %v830
    %v1028 = vunpack.c.l.b16 %v831
    %v1029 = vunpack.c.l.b16 %v832
    %v1030 = vunpack.c.l.b16 %v833
    %v1031 = vunpack.c.l.b16 %v834
    %v1032 = vunpack.c.l.b16 %v835
    %v1033 = vunpack.c.l.b16 %v836
    %v1034 = vpack.c.b16 %v1017, %v1016
    %v1035 = vpack.c.b16 %v1019, %v1018
    %v1036 = vpack.c.b16 %v1021, %v1020
    %v1037 = vpack.c.b16 %v1023, %v1022
    %v1038 = vpack.c.b16 %v1025, %v1024
    %v1039 = vpack.c.b16 %v1027, %v1026
    %v1040 = vpack.c.b16 %v1029, %v1028
    %v1041 = vpack.c.b16 %v1031, %v1030
    %v1042 = vpack.c.b16 %v1033, %v1032
    %v1051 = vsel %vm928, %v804, 0
    %v1053 = vsel %vm928, %v811, 0
    %v1055 = vsel %vm928, %v818, 0
    %v1058 = vsel %vm938, %v1042, 0
    %1060 = vmatprep.subr.bf16.mxu0 0
    %1061 = vmatpush1.bf16.msra.mxu0 %v1034
    %1062 = vmatprep.subr.bf16.mxu0 0
    %1063 = vmatpush1.bf16.msra.mxu0 %v1035
    %1064 = vmatprep.subr.bf16.mxu0 0
    %1065 = vmatpush1.bf16.msra.mxu0 %v1036
    %1066 = vmatprep.subr.bf16.mxu0 0
    %1067 = vmatpush1.bf16.msra.mxu0 %v1037
    %1068 = vmatprep.subr.bf16.mxu0 0
    %1069 = vmatpush1.bf16.msra.mxu0 %v1038
    %1070 = vmatprep.subr.bf16.mxu0 0
    %1071 = vmatpush1.bf16.msra.mxu0 %v1039
    %1072 = vmatprep.subr.bf16.mxu0 0
    %1073 = vmatpush1.bf16.msra.mxu0 %v1040
    %1074 = vmatprep.subr.bf16.mxu0 0
    %1075 = vmatpush1.bf16.msra.mxu0 %v1041
    %1076 = vmatprep.subr.bf16.mxu0 0
    %1077 = vmatpush1.bf16.msra.mxu0 %v1058
    %1078 = vmatprep.subr.bf16.mxu0 0
    %1079 = vmatpush1.bf16.msra.mxu0 0
    %1080 = vmatprep.subr.bf16.mxu0 0
    %1081 = vmatpush1.bf16.msra.mxu0 0
    %1082 = vmatprep.subr.bf16.mxu0 0
    %1083 = vmatpush1.bf16.msra.mxu0 0
    %1084 = vmatprep.subr.bf16.mxu0 0
    %1085 = vmatpush1.bf16.msra.mxu0 0
    %1086 = vmatprep.subr.bf16.mxu0 0
    %1087 = vmatpush1.bf16.msra.mxu0 0
    %1088 = vmatprep.subr.bf16.mxu0 0
    %1089 = vmatpush1.bf16.msra.mxu0 0
    %1090 = vmatprep.subr.bf16.mxu0 0
    %1091 = vmatpush1.bf16.msra.mxu0 0
    %1092 = vmatprep.mubr.bf16.mxu0 %v1051
    %1093 = vmatmul.mubr.bf16.gmra.mrb[0].mxu0 %v800
    %v1094 = vpop.f32.mrb[0].mxu0
    %v1095 = vadd.f32 %v977, %v1094
    %v1096 = vpop.f32.mrb[0].mxu0
    %v1097 = vpop.f32.mrb[0].mxu0
    %v1098 = vadd.f32 %v980, %v1097
    %v1099 = vpop.f32.mrb[0].mxu0
    %1100 = vmatprep.mubr.bf16.mxu0 %v1053
    %1101 = vmatmul.mubr.bf16.gmra.mrb[0].mxu0 %v807
    %v1102 = vpop.f32.mrb[0].mxu0
    %v1103 = vadd.f32 %v985, %v1102
    %v1104 = vpop.f32.mrb[0].mxu0
    %v1105 = vpop.f32.mrb[0].mxu0
    %v1106 = vadd.f32 %v988, %v1105
    %v1107 = vpop.f32.mrb[0].mxu0
    %1108 = vmatprep.mubr.bf16.mxu0 %v1055
    %1109 = vmatmul.mubr.bf16.gmra.mrb[0].mxu0 %v814
    %v1110 = vpop.f32.mrb[0].mxu0
    %v1111 = vadd.f32 %v993, %v1110
    %v1112 = vpop.f32.mrb[0].mxu0
    %v1113 = vpop.f32.mrb[0].mxu0
    %v1114 = vpop.f32.mrb[0].mxu0
    %1115 = vdwg.mxu0
    %s1116 = scalar_lea.vmem %s3, 144
    %v1117 = vld [vmem:[%s1116] sm:$0xf]
    %v1118 = vld [vmem:[%s1116 + $0x4] sm:$0xf]
    %v1119 = vld [vmem:[%s1116 + $0x8] sm:$0xf]
    %v1120 = vld [vmem:[%s1116 + $0xc] sm:$0xf]
    %v1121 = vld [vmem:[%s1116 + $0x10] sm:$0xf]
    %v1122 = vld [vmem:[%s1116 + $0x14] sm:$0xf]
    %v1123 = vld [vmem:[%s1116 + $0x18] sm:$0xf]
    %v1124 = vld [vmem:[%s1116 + $0x1c] sm:$0xf]
    %v1125 = vld [vmem:[%s1116 + $0x20] sm:$0xf]
    %v1126 = vld [vmem:[%s1116 + $0x24] sm:$0xf]
    %v1127 = vld [vmem:[%s1116 + $0x28] sm:$0xf]
    %v1128 = vld [vmem:[%s1116 + $0x2c] sm:$0xf]
    %v1129 = vld [vmem:[%s1116 + $0x30] sm:$0xf]
    %v1130 = vld [vmem:[%s1116 + $0x34] sm:$0xf]
    %v1131 = vld [vmem:[%s1116 + $0x38] sm:$0xf]
    %v1132 = vld [vmem:[%s1116 + $0x3c] sm:$0xf]
    %v1133 = vld [vmem:[%s1116 + $0x40] sm:$0xf]
    %v1134 = vld [vmem:[%s1116 + $0x44] sm:$0x3]
    %v1153 = vunpack.c.l.b16 %v1117
    %v1154 = vunpack.c.l.b16 %v1118
    %v1155 = vunpack.c.l.b16 %v1119
    %v1156 = vunpack.c.l.b16 %v1120
    %v1157 = vunpack.c.l.b16 %v1121
    %v1158 = vunpack.c.l.b16 %v1122
    %v1159 = vunpack.c.l.b16 %v1123
    %v1160 = vunpack.c.l.b16 %v1124
    %v1161 = vunpack.c.l.b16 %v1125
    %v1162 = vunpack.c.l.b16 %v1126
    %v1163 = vunpack.c.l.b16 %v1127
    %v1164 = vunpack.c.l.b16 %v1128
    %v1165 = vunpack.c.l.b16 %v1129
    %v1166 = vunpack.c.l.b16 %v1130
    %v1167 = vunpack.c.l.b16 %v1131
    %v1168 = vunpack.c.l.b16 %v1132
    %v1169 = vunpack.c.l.b16 %v1133
    %v1170 = vunpack.c.l.b16 %v1134
    %v1171 = vpack.c.b16 %v1154, %v1153
    %v1172 = vpack.c.b16 %v1156, %v1155
    %v1173 = vpack.c.b16 %v1158, %v1157
    %v1174 = vpack.c.b16 %v1160, %v1159
    %v1175 = vpack.c.b16 %v1162, %v1161
    %v1176 = vpack.c.b16 %v1164, %v1163
    %v1177 = vpack.c.b16 %v1166, %v1165
    %v1178 = vpack.c.b16 %v1168, %v1167
    %v1179 = vpack.c.b16 %v1170, %v1169
    %v1189 = vsel %vm928, %v784, 0
    %v1192 = vsel %vm938, %v1179, 0
    %1194 = vmatprep.subr.bf16.mxu0 0
    %1195 = vmatpush1.bf16.msra.mxu0 %v1171
    %1196 = vmatprep.subr.bf16.mxu0 0
    %1197 = vmatpush1.bf16.msra.mxu0 %v1172
    %1198 = vmatprep.subr.bf16.mxu0 0
    %1199 = vmatpush1.bf16.msra.mxu0 %v1173
    %1200 = vmatprep.subr.bf16.mxu0 0
    %1201 = vmatpush1.bf16.msra.mxu0 %v1174
    %1202 = vmatprep.subr.bf16.mxu0 0
    %1203 = vmatpush1.bf16.msra.mxu0 %v1175
    %1204 = vmatprep.subr.bf16.mxu0 0
    %1205 = vmatpush1.bf16.msra.mxu0 %v1176
    %1206 = vmatprep.subr.bf16.mxu0 0
    %1207 = vmatpush1.bf16.msra.mxu0 %v1177
    %1208 = vmatprep.subr.bf16.mxu0 0
    %1209 = vmatpush1.bf16.msra.mxu0 %v1178
    %1210 = vmatprep.subr.bf16.mxu0 0
    %1211 = vmatpush1.bf16.msra.mxu0 %v1192
    %1212 = vmatprep.subr.bf16.mxu0 0
    %1213 = vmatpush1.bf16.msra.mxu0 0
    %1214 = vmatprep.subr.bf16.mxu0 0
    %1215 = vmatpush1.bf16.msra.mxu0 0
    %1216 = vmatprep.subr.bf16.mxu0 0
    %1217 = vmatpush1.bf16.msra.mxu0 0
    %1218 = vmatprep.subr.bf16.mxu0 0
    %1219 = vmatpush1.bf16.msra.mxu0 0
    %1220 = vmatprep.subr.bf16.mxu0 0
    %1221 = vmatpush1.bf16.msra.mxu0 0
    %1222 = vmatprep.subr.bf16.mxu0 0
    %1223 = vmatpush1.bf16.msra.mxu0 0
    %1224 = vmatprep.subr.bf16.mxu0 0
    %1225 = vmatpush1.bf16.msra.mxu0 0
    %1226 = vmatprep.mubr.bf16.mxu0 %v1053
    %1227 = vmatmul.mubr.bf16.gmra.mrb[0].mxu0 %v807
    %v1228 = vpop.f32.mrb[0].mxu0
    %v1229 = vadd.f32 0.0, %v1228
    %v1230 = vpop.f32.mrb[0].mxu0
    %v1231 = vpop.f32.mrb[0].mxu0
    %v1232 = vadd.f32 0.0, %v1231
    %v1233 = vpop.f32.mrb[0].mxu0
    %1234 = vmatprep.mubr.bf16.mxu0 %v1055
    %1235 = vmatmul.mubr.bf16.gmra.mrb[0].mxu0 %v814
    %v1236 = vpop.f32.mrb[0].mxu0
    %v1237 = vadd.f32 0.0, %v1236
    %v1238 = vpop.f32.mrb[0].mxu0
    %v1239 = vpop.f32.mrb[0].mxu0
    %v1240 = vadd.f32 0.0, %v1239
    %v1241 = vpop.f32.mrb[0].mxu0
    %1242 = vmatprep.mubr.bf16.mxu0 %v1189
    %1243 = vmatmul.mubr.bf16.gmra.mrb[0].mxu0 %v783
    %v1244 = vpop.f32.mrb[0].mxu0
    %v1245 = vadd.f32 0.0, %v1244
    %v1246 = vpop.f32.mrb[0].mxu0
    %v1247 = vpop.f32.mrb[0].mxu0
    %v1248 = vpop.f32.mrb[0].mxu0
    %1249 = vdwg.mxu0
    %v1250 = vadd.f32 %v1095, %v1229
    %v1251 = vadd.f32 %v1098, %v1232
    %v1252 = vadd.f32 %v1103, %v1237
    %v1253 = vadd.f32 %v1106, %v1240
    %v1254 = vadd.f32 %v1111, %v1245
    %v1255 = vld [vmem:[%s4] sm:$0x1]
    %v1257 = vlaneseq
    %v1258 = vshrl.u32 %v1257, 7
    %v1259 = vsub.s32 0, %v1258
    %v1260 = vrot.slane %v1255, %v1259
    %v1262 = vadd.f32 %v1250, %v1260
    %v1263 = vadd.f32 %v1251, %v1260
    %v1264 = vadd.f32 %v1252, %v1260
    %v1265 = vadd.f32 %v1253, %v1260
    %v1266 = vadd.f32 %v1254, %v1260
    %vm1267 = vcmp.ge.f32.partialorder %v1262, 0.0
    %vm1268 = vcmp.ge.f32.partialorder %v1263, 0.0
    %vm1269 = vcmp.ge.f32.partialorder %v1264, 0.0
    %vm1270 = vcmp.ge.f32.partialorder %v1265, 0.0
    %vm1271 = vcmp.ge.f32.partialorder %v1266, 0.0
    %s1272 = sld [smem:[#allocation2 + $0x1]]
    %v1273 = vstv %s1272
    %v1274 = vmul.f32 %v1273, %v1262
    %v1275 = vmul.f32 %v1273, %v1263
    %v1276 = vmul.f32 %v1273, %v1264
    %v1277 = vmul.f32 %v1273, %v1265
    %v1278 = vmul.f32 %v1273, %v1266
    %v1279 = vsel %vm1267, %v1262, %v1274
    %v1280 = vsel %vm1268, %v1263, %v1275
    %v1281 = vsel %vm1269, %v1264, %v1276
    %v1282 = vsel %vm1270, %v1265, %v1277
    %v1283 = vsel %vm1271, %v1266, %v1278
    %v1284 = vpack.c.bf16 %v1280, %v1279
    %v1285 = vpack.c.bf16 %v1282, %v1281
    %v1286 = vpack.c.bf16 %v1283, %v1283
    %v1287 = vld [vmem:[%s5] sm:$0xf]
    %v1288 = vld [vmem:[%s5 + $0x4] sm:$0xf]
    %v1289 = vld [vmem:[%s5 + $0x8] sm:$0xf]
    %v1290 = vld [vmem:[%s5 + $0xc] sm:$0xf]
    %v1291 = vld [vmem:[%s5 + $0x10] sm:$0xf]
    %v1292 = vld [vmem:[%s5 + $0x14] sm:$0xf]
    %v1293 = vld [vmem:[%s5 + $0x18] sm:$0xf]
    %v1294 = vld [vmem:[%s5 + $0x1c] sm:$0xf]
    %v1295 = vld [vmem:[%s5 + $0x20] sm:$0xf]
    %v1296 = vld [vmem:[%s5 + $0x24] sm:$0xf]
    %s1297 = scalar_lea.vmem %s5, 40
    %v1298 = vld [vmem:[%s1297] sm:$0xf]
    %v1299 = vld [vmem:[%s1297 + $0x4] sm:$0xf]
    %v1300 = vld [vmem:[%s1297 + $0x8] sm:$0xf]
    %v1301 = vld [vmem:[%s1297 + $0xc] sm:$0xf]
    %v1302 = vld [vmem:[%s1297 + $0x10] sm:$0xf]
    %v1303 = vld [vmem:[%s1297 + $0x14] sm:$0xf]
    %v1304 = vld [vmem:[%s1297 + $0x18] sm:$0xf]
    %v1305 = vld [vmem:[%s1297 + $0x1c] sm:$0xf]
    %v1306 = vld [vmem:[%s1297 + $0x20] sm:$0xf]
    %v1307 = vld [vmem:[%s1297 + $0x24] sm:$0xf]
    %v1310 = vrot.slane %v1284, 4
    %v1311 = vrot.slane %v1285, 4
    %v1312 = vsel %vm712, %v1310, %v1311
    %v1323 = vunpack.c.l.b16 %v1298
    %v1324 = vunpack.c.l.b16 %v1299
    %v1325 = vunpack.c.l.b16 %v1300
    %v1326 = vunpack.c.l.b16 %v1301
    %v1327 = vunpack.c.l.b16 %v1302
    %v1328 = vunpack.c.l.b16 %v1303
    %v1329 = vunpack.c.l.b16 %v1304
    %v1330 = vunpack.c.l.b16 %v1305
    %v1331 = vunpack.c.l.b16 %v1306
    %v1332 = vunpack.c.l.b16 %v1307
    %v1333 = vpack.c.b16 %v1324, %v1323
    %v1334 = vpack.c.b16 %v1326, %v1325
    %v1335 = vpack.c.b16 %v1328, %v1327
    %v1336 = vpack.c.b16 %v1330, %v1329
    %v1337 = vpack.c.b16 %v1332, %v1331
    %vm1343 = vcmask 654336
    %v1345 = vsel %vm1343, %v1312, 0
    %v1348 = vsel %vm1343, %v1311, 0
    %1350 = vmatprep.subr.bf16.mxu0 0
    %1351 = vmatpush1.bf16.msra.mxu0 %v1333
    %1352 = vmatprep.subr.bf16.mxu0 0
    %1353 = vmatpush1.bf16.msra.mxu0 %v1334
    %1354 = vmatprep.subr.bf16.mxu0 0
    %1355 = vmatpush1.bf16.msra.mxu0 %v1335
    %1356 = vmatprep.subr.bf16.mxu0 0
    %1357 = vmatpush1.bf16.msra.mxu0 %v1336
    %1358 = vmatprep.subr.bf16.mxu0 0
    %1359 = vmatpush1.bf16.msra.mxu0 %v1337
    %1360 = vmatprep.subr.bf16.mxu0 0
    %1361 = vmatpush1.bf16.msra.mxu0 0
    %1362 = vmatprep.subr.bf16.mxu0 0
    %1363 = vmatpush1.bf16.msra.mxu0 0
    %1364 = vmatprep.subr.bf16.mxu0 0
    %1365 = vmatpush1.bf16.msra.mxu0 0
    %1366 = vmatprep.subr.bf16.mxu0 0
    %1367 = vmatpush1.bf16.msra.mxu0 0
    %1368 = vmatprep.subr.bf16.mxu0 0
    %1369 = vmatpush1.bf16.msra.mxu0 0
    %1370 = vmatprep.subr.bf16.mxu0 0
    %1371 = vmatpush1.bf16.msra.mxu0 0
    %1372 = vmatprep.subr.bf16.mxu0 0
    %1373 = vmatpush1.bf16.msra.mxu0 0
    %1374 = vmatprep.subr.bf16.mxu0 0
    %1375 = vmatpush1.bf16.msra.mxu0 0
    %1376 = vmatprep.subr.bf16.mxu0 0
    %1377 = vmatpush1.bf16.msra.mxu0 0
    %1378 = vmatprep.subr.bf16.mxu0 0
    %1379 = vmatpush1.bf16.msra.mxu0 0
    %1380 = vmatprep.subr.bf16.mxu0 0
    %1381 = vmatpush1.bf16.msra.mxu0 0
    %1382 = vmatprep.mubr.bf16.mxu0 0
    %1383 = vmatmul.mubr.bf16.gmra.mrb[0].mxu0 %v1345
    %v1384 = vpop.f32.mrb[0].mxu0
    %v1385 = vadd.f32 0.0, %v1384
    %v1386 = vpop.f32.mrb[0].mxu0
    %v1387 = vpop.f32.mrb[0].mxu0
    %v1388 = vadd.f32 0.0, %v1387
    %v1389 = vpop.f32.mrb[0].mxu0
    %1390 = vmatprep.mubr.bf16.mxu0 0
    %1391 = vmatmul.mubr.bf16.gmra.mrb[0].mxu0 %v1348
    %v1392 = vpop.f32.mrb[0].mxu0
    %v1393 = vadd.f32 0.0, %v1392
    %v1394 = vpop.f32.mrb[0].mxu0
    %v1395 = vpop.f32.mrb[0].mxu0
    %v1396 = vpop.f32.mrb[0].mxu0
    %1397 = vdwg.mxu0
    %v1408 = vunpack.c.l.b16 %v1287
    %v1409 = vunpack.c.l.b16 %v1288
    %v1410 = vunpack.c.l.b16 %v1289
    %v1411 = vunpack.c.l.b16 %v1290
    %v1412 = vunpack.c.l.b16 %v1291
    %v1413 = vunpack.c.l.b16 %v1292
    %v1414 = vunpack.c.l.b16 %v1293
    %v1415 = vunpack.c.l.b16 %v1294
    %v1416 = vunpack.c.l.b16 %v1295
    %v1417 = vunpack.c.l.b16 %v1296
    %v1418 = vpack.c.b16 %v1409, %v1408
    %v1419 = vpack.c.b16 %v1411, %v1410
    %v1420 = vpack.c.b16 %v1413, %v1412
    %v1421 = vpack.c.b16 %v1415, %v1414
    %v1422 = vpack.c.b16 %v1417, %v1416
    %v1429 = vsel %vm1343, %v1284, 0
    %v1432 = vsel %vm1343, %v1285, 0
    %1434 = vmatprep.subr.bf16.mxu0 0
    %1435 = vmatpush1.bf16.msra.mxu0 %v1418
    %1436 = vmatprep.subr.bf16.mxu0 0
    %1437 = vmatpush1.bf16.msra.mxu0 %v1419
    %1438 = vmatprep.subr.bf16.mxu0 0
    %1439 = vmatpush1.bf16.msra.mxu0 %v1420
    %1440 = vmatprep.subr.bf16.mxu0 0
    %1441 = vmatpush1.bf16.msra.mxu0 %v1421
    %1442 = vmatprep.subr.bf16.mxu0 0
    %1443 = vmatpush1.bf16.msra.mxu0 %v1422
    %1444 = vmatprep.subr.bf16.mxu0 0
    %1445 = vmatpush1.bf16.msra.mxu0 0
    %1446 = vmatprep.subr.bf16.mxu0 0
    %1447 = vmatpush1.bf16.msra.mxu0 0
    %1448 = vmatprep.subr.bf16.mxu0 0
    %1449 = vmatpush1.bf16.msra.mxu0 0
    %1450 = vmatprep.subr.bf16.mxu0 0
    %1451 = vmatpush1.bf16.msra.mxu0 0
    %1452 = vmatprep.subr.bf16.mxu0 0
    %1453 = vmatpush1.bf16.msra.mxu0 0
    %1454 = vmatprep.subr.bf16.mxu0 0
    %1455 = vmatpush1.bf16.msra.mxu0 0
    %1456 = vmatprep.subr.bf16.mxu0 0
    %1457 = vmatpush1.bf16.msra.mxu0 0
    %1458 = vmatprep.subr.bf16.mxu0 0
    %1459 = vmatpush1.bf16.msra.mxu0 0
    %1460 = vmatprep.subr.bf16.mxu0 0
    %1461 = vmatpush1.bf16.msra.mxu0 0
    %1462 = vmatprep.subr.bf16.mxu0 0
    %1463 = vmatpush1.bf16.msra.mxu0 0
    %1464 = vmatprep.subr.bf16.mxu0 0
    %1465 = vmatpush1.bf16.msra.mxu0 0
    %1466 = vmatprep.mubr.bf16.mxu0 0
    %1467 = vmatmul.mubr.bf16.gmra.mrb[0].mxu0 %v1429
    %v1468 = vpop.f32.mrb[0].mxu0
    %v1469 = vadd.f32 %v1385, %v1468
    %v1470 = vpop.f32.mrb[0].mxu0
    %v1471 = vpop.f32.mrb[0].mxu0
    %v1472 = vadd.f32 %v1388, %v1471
    %v1473 = vpop.f32.mrb[0].mxu0
    %1474 = vmatprep.mubr.bf16.mxu0 0
    %1475 = vmatmul.mubr.bf16.gmra.mrb[0].mxu0 %v1432
    %v1476 = vpop.f32.mrb[0].mxu0
    %v1477 = vadd.f32 %v1393, %v1476
    %v1478 = vpop.f32.mrb[0].mxu0
    %v1479 = vpop.f32.mrb[0].mxu0
    %v1480 = vpop.f32.mrb[0].mxu0
    %1481 = vdwg.mxu0
    %s1482 = scalar_lea.vmem %s5, 80
    %v1483 = vld [vmem:[%s1482] sm:$0xf]
    %v1484 = vld [vmem:[%s1482 + $0x4] sm:$0xf]
    %v1485 = vld [vmem:[%s1482 + $0x8] sm:$0xf]
    %v1486 = vld [vmem:[%s1482 + $0xc] sm:$0xf]
    %v1487 = vld [vmem:[%s1482 + $0x10] sm:$0xf]
    %v1488 = vld [vmem:[%s1482 + $0x14] sm:$0xf]
    %v1489 = vld [vmem:[%s1482 + $0x18] sm:$0xf]
    %v1490 = vld [vmem:[%s1482 + $0x1c] sm:$0xf]
    %v1491 = vld [vmem:[%s1482 + $0x20] sm:$0xf]
    %v1492 = vld [vmem:[%s1482 + $0x24] sm:$0xf]
    %v1503 = vunpack.c.l.b16 %v1483
    %v1504 = vunpack.c.l.b16 %v1484
    %v1505 = vunpack.c.l.b16 %v1485
    %v1506 = vunpack.c.l.b16 %v1486
    %v1507 = vunpack.c.l.b16 %v1487
    %v1508 = vunpack.c.l.b16 %v1488
    %v1509 = vunpack.c.l.b16 %v1489
    %v1510 = vunpack.c.l.b16 %v1490
    %v1511 = vunpack.c.l.b16 %v1491
    %v1512 = vunpack.c.l.b16 %v1492
    %v1513 = vpack.c.b16 %v1504, %v1503
    %v1514 = vpack.c.b16 %v1506, %v1505
    %v1515 = vpack.c.b16 %v1508, %v1507
    %v1516 = vpack.c.b16 %v1510, %v1509
    %v1517 = vpack.c.b16 %v1512, %v1511
    %v1524 = vsel %vm1343, %v1286, 0
    %1526 = vmatprep.subr.bf16.mxu0 0
    %1527 = vmatpush1.bf16.msra.mxu0 %v1513
    %1528 = vmatprep.subr.bf16.mxu0 0
    %1529 = vmatpush1.bf16.msra.mxu0 %v1514
    %1530 = vmatprep.subr.bf16.mxu0 0
    %1531 = vmatpush1.bf16.msra.mxu0 %v1515
    %1532 = vmatprep.subr.bf16.mxu0 0
    %1533 = vmatpush1.bf16.msra.mxu0 %v1516
    %1534 = vmatprep.subr.bf16.mxu0 0
    %1535 = vmatpush1.bf16.msra.mxu0 %v1517
    %1536 = vmatprep.subr.bf16.mxu0 0
    %1537 = vmatpush1.bf16.msra.mxu0 0
    %1538 = vmatprep.subr.bf16.mxu0 0
    %1539 = vmatpush1.bf16.msra.mxu0 0
    %1540 = vmatprep.subr.bf16.mxu0 0
    %1541 = vmatpush1.bf16.msra.mxu0 0
    %1542 = vmatprep.subr.bf16.mxu0 0
    %1543 = vmatpush1.bf16.msra.mxu0 0
    %1544 = vmatprep.subr.bf16.mxu0 0
    %1545 = vmatpush1.bf16.msra.mxu0 0
    %1546 = vmatprep.subr.bf16.mxu0 0
    %1547 = vmatpush1.bf16.msra.mxu0 0
    %1548 = vmatprep.subr.bf16.mxu0 0
    %1549 = vmatpush1.bf16.msra.mxu0 0
    %1550 = vmatprep.subr.bf16.mxu0 0
    %1551 = vmatpush1.bf16.msra.mxu0 0
    %1552 = vmatprep.subr.bf16.mxu0 0
    %1553 = vmatpush1.bf16.msra.mxu0 0
    %1554 = vmatprep.subr.bf16.mxu0 0
    %1555 = vmatpush1.bf16.msra.mxu0 0
    %1556 = vmatprep.subr.bf16.mxu0 0
    %1557 = vmatpush1.bf16.msra.mxu0 0
    %1558 = vmatprep.mubr.bf16.mxu0 0
    %1559 = vmatmul.mubr.bf16.gmra.mrb[0].mxu0 %v1432
    %v1560 = vpop.f32.mrb[0].mxu0
    %v1561 = vadd.f32 0.0, %v1560
    %v1562 = vpop.f32.mrb[0].mxu0
    %v1563 = vpop.f32.mrb[0].mxu0
    %v1564 = vadd.f32 0.0, %v1563
    %v1565 = vpop.f32.mrb[0].mxu0
    %1566 = vmatprep.mubr.bf16.mxu0 0
    %1567 = vmatmul.mubr.bf16.gmra.mrb[0].mxu0 %v1524
    %v1568 = vpop.f32.mrb[0].mxu0
    %v1569 = vadd.f32 0.0, %v1568
    %v1570 = vpop.f32.mrb[0].mxu0
    %v1571 = vpop.f32.mrb[0].mxu0
    %v1572 = vpop.f32.mrb[0].mxu0
    %1573 = vdwg.mxu0
    %v1574 = vadd.f32 %v1469, %v1561
    %v1575 = vadd.f32 %v1472, %v1564
    %v1576 = vadd.f32 %v1477, %v1569
    %v1577 = vld [vmem:[%s6] sm:$0x1]
    %v1579 = vlaneseq
    %v1580 = vshrl.u32 %v1579, 7
    %v1581 = vsub.s32 0, %v1580
    %v1582 = vrot.slane %v1577, %v1581
    %v1584 = vadd.f32 %v1574, %v1582
    %v1585 = vadd.f32 %v1575, %v1582
    %v1586 = vadd.f32 %v1576, %v1582
    %vm1587 = vcmp.ge.f32.partialorder %v1584, 0.0
    %vm1588 = vcmp.ge.f32.partialorder %v1585, 0.0
    %vm1589 = vcmp.ge.f32.partialorder %v1586, 0.0
    %s1590 = sld [smem:[#allocation2 + $0x2]]
    %v1591 = vstv %s1590
    %v1592 = vmul.f32 %v1591, %v1584
    %v1593 = vmul.f32 %v1591, %v1585
    %v1594 = vmul.f32 %v1591, %v1586
    %v1595 = vsel %vm1587, %v1584, %v1592
    %v1596 = vsel %vm1588, %v1585, %v1593
    %v1597 = vsel %vm1589, %v1586, %v1594
    %v1598 = vpack.c.bf16 %v1596, %v1595
    %v1599 = vpack.c.bf16 %v1597, %v1597
    %v1600 = vld [vmem:[%s7] sm:$0xf]
    %v1601 = vld [vmem:[%s7 + $0x4] sm:$0xf]
    %v1602 = vld [vmem:[%s7 + $0x8] sm:$0xf]
    %v1603 = vld [vmem:[%s7 + $0xc] sm:$0xf]
    %v1604 = vld [vmem:[%s7 + $0x10] sm:$0xf]
    %v1605 = vld [vmem:[%s7 + $0x14] sm:$0xf]
    %v1606 = vld [vmem:[%s7 + $0x18] sm:$0xf]
    %v1607 = vld [vmem:[%s7 + $0x1c] sm:$0xf]
    %v1608 = vld [vmem:[%s7 + $0x20] sm:$0xf]
    %v1609 = vld [vmem:[%s7 + $0x24] sm:$0xf]
    %v1610 = vld [vmem:[%s7 + $0x28] sm:$0xf]
    %v1611 = vld [vmem:[%s7 + $0x2c] sm:$0xf]
    %v1612 = vld [vmem:[%s8] sm:$0x1]
    %v1614 = vlaneseq
    %v1615 = vshrl.u32 %v1614, 7
    %v1616 = vsub.s32 0, %v1615
    %v1617 = vrot.slane %v1612, %v1616
    %v1631 = vunpack.c.l.b16 %v1600
    %v1632 = vunpack.c.l.b16 %v1601
    %v1633 = vunpack.c.l.b16 %v1602
    %v1634 = vunpack.c.l.b16 %v1603
    %v1635 = vunpack.c.l.b16 %v1604
    %v1636 = vunpack.c.l.b16 %v1605
    %v1637 = vunpack.c.l.b16 %v1606
    %v1638 = vunpack.c.l.b16 %v1607
    %v1639 = vunpack.c.l.b16 %v1608
    %v1640 = vunpack.c.l.b16 %v1609
    %v1641 = vunpack.c.l.b16 %v1610
    %v1642 = vunpack.c.l.b16 %v1611
    %v1643 = vpack.c.b16 %v1632, %v1631
    %v1644 = vpack.c.b16 %v1634, %v1633
    %v1645 = vpack.c.b16 %v1636, %v1635
    %v1646 = vpack.c.b16 %v1638, %v1637
    %v1647 = vpack.c.b16 %v1640, %v1639
    %v1648 = vpack.c.b16 %v1642, %v1641
    %vm1655 = vcmask 785408
    %v1657 = vsel %vm1655, %v1598, 0
    %v1660 = vsel %vm1655, %v1599, 0
    %1662 = vmatprep.subr.bf16.mxu0 0
    %1663 = vmatpush1.bf16.msra.mxu0 %v1643
    %1664 = vmatprep.subr.bf16.mxu0 0
    %1665 = vmatpush1.bf16.msra.mxu0 %v1644
    %1666 = vmatprep.subr.bf16.mxu0 0
    %1667 = vmatpush1.bf16.msra.mxu0 %v1645
    %1668 = vmatprep.subr.bf16.mxu0 0
    %1669 = vmatpush1.bf16.msra.mxu0 %v1646
    %1670 = vmatprep.subr.bf16.mxu0 0
    %1671 = vmatpush1.bf16.msra.mxu0 %v1647
    %1672 = vmatprep.subr.bf16.mxu0 0
    %1673 = vmatpush1.bf16.msra.mxu0 %v1648
    %1674 = vmatprep.subr.bf16.mxu0 0
    %1675 = vmatpush1.bf16.msra.mxu0 0
    %1676 = vmatprep.subr.bf16.mxu0 0
    %1677 = vmatpush1.bf16.msra.mxu0 0
    %1678 = vmatprep.subr.bf16.mxu0 0
    %1679 = vmatpush1.bf16.msra.mxu0 0
    %1680 = vmatprep.subr.bf16.mxu0 0
    %1681 = vmatpush1.bf16.msra.mxu0 0
    %1682 = vmatprep.subr.bf16.mxu0 0
    %1683 = vmatpush1.bf16.msra.mxu0 0
    %1684 = vmatprep.subr.bf16.mxu0 0
    %1685 = vmatpush1.bf16.msra.mxu0 0
    %1686 = vmatprep.subr.bf16.mxu0 0
    %1687 = vmatpush1.bf16.msra.mxu0 0
    %1688 = vmatprep.subr.bf16.mxu0 0
    %1689 = vmatpush1.bf16.msra.mxu0 0
    %1690 = vmatprep.subr.bf16.mxu0 0
    %1691 = vmatpush1.bf16.msra.mxu0 0
    %1692 = vmatprep.subr.bf16.mxu0 0
    %1693 = vmatpush1.bf16.msra.mxu0 0
    %1694 = vmatprep.mubr.bf16.mxu0 0
    %1695 = vmatmul.mubr.bf16.gmra.mrb[0].mxu0 %v1657
    %v1696 = vpop.f32.mrb[0].mxu0
    %v1697 = vadd.f32 %v1617, %v1696
    %v1698 = vpop.f32.mrb[0].mxu0
    %v1699 = vpop.f32.mrb[0].mxu0
    %v1700 = vadd.f32 %v1617, %v1699
    %v1701 = vpop.f32.mrb[0].mxu0
    %1702 = vmatprep.mubr.bf16.mxu0 0
    %1703 = vmatmul.mubr.bf16.gmra.mrb[0].mxu0 %v1660
    %v1704 = vpop.f32.mrb[0].mxu0
    %v1705 = vadd.f32 %v1617, %v1704
    %v1706 = vpop.f32.mrb[0].mxu0
    %v1707 = vpop.f32.mrb[0].mxu0
    %v1708 = vpop.f32.mrb[0].mxu0
    %1709 = vdwg.mxu0
    %vm1710 = vcmask 195584
    %1711 = vst.msk [vmem:[%s10] sm:$0xff] %vm1710, %v1697
    %1712 = vst.msk [vmem:[%s10 + $0x8] sm:$0xff] %vm1710, %v1700
    %1713 = vst.msk [vmem:[%s10 + $0x10] sm:$0xff] %vm1710, %v1705
    // Predicated region
    $region46: #{pnet_forward.1} parent=1 // pred_check
      _
    $region47: #{pnet_forward.1} parent=1 // pred_check_branch
      %1715 = sbr.rel (0) target = $region49
    $region48: #{pnet_forward.1} parent=1 // pred_region
      _
    $region49: #{pnet_forward.1} parent=1 // pred_fallthru
      _
    // Predicated region
    $region50: #{pnet_forward.1} parent=1 // pred_check
      _
    $region51: #{pnet_forward.1} parent=1 // pred_check_branch
      %1717 = sbr.rel (0) target = $region53
    $region52: #{pnet_forward.1} parent=1 // pred_region
      _
    $region53: #{pnet_forward.1} parent=1 // pred_fallthru
      _
    %1718 = vsyncpa [#allocation3], 1

</llo_original>
